<compile_context>
chip_gen: v7x
topology: tpu7x:2x2x1
jax: 0.10.0
libtpu: 0.0.40
codegen_flags: <defaults>
</compile_context>

<pallas_src>
import math

import jax
import jax.numpy as jnp
import numpy as np
from jax.experimental import pallas as pl
from jax.experimental.pallas import tpu as pltpu

D = 128        # embedding_dim
HIDDEN = 768   # CodeBERT hidden size feeding ASTValueEmbedding.proj
NEG_LOG_10000 = -math.log(10000.0)
HALF_PI = math.pi / 2.0


# ----------------------------- in-kernel helpers -----------------------------

def _one_hot_gather(idx_col, table):
    """Embedding lookup as one-hot matmul. idx_col: (N,1) i32, table: (V,D) f32.

    precision=HIGHEST keeps the f32 table exact on the MXU (multi-pass),
    matching torch nn.Embedding.  Out-of-range indices silently produce a
    zero row instead of raising.
    """
    n = idx_col.shape[0]
    v = table.shape[0]
    iota = jax.lax.broadcasted_iota(jnp.int32, (n, v), 1)
    oh = (iota == idx_col).astype(table.dtype)
    return jnp.dot(oh, table,
                   preferred_element_type=jnp.float32,
                   precision=jax.lax.Precision.HIGHEST)


def _sin_cos_encoding(pos_col, d):
    """Matches torch sin_cos_encoding. pos_col: (N,1) f32 -> (N,d) f32.

    Frequencies/phase are (1,d) rows (EUP exp count = d, not N*d); cos(x) is
    computed as sin(x + pi/2) so only one transcendental pass over (N,d).
    """
    col = jax.lax.broadcasted_iota(jnp.int32, (1, d), 1)       # (1, d)
    even = (col // 2) * 2                                      # 0,0,2,2,4,4,...
    inv_freq = jnp.exp(even.astype(jnp.float32) * (NEG_LOG_10000 / d))
    phase = jnp.where(col % 2 == 0, 0.0, HALF_PI).astype(jnp.float32)
    return jnp.sin(pos_col * inv_freq + phase)                 # (N, d)


# --------------------------------- kernels -----------------------------------

def edge_kernel(idx_ref, node_tab_ref, edge_tab_ref, out_ref):
    idx = idx_ref[0]                                   # (TN, 3) int32
    node_tab = node_tab_ref[...]
    edge_tab = edge_tab_ref[...]
    # three dense, lane-aligned (TN, 128) slab stores into the (1, TN, 384) block
    out_ref[0, :, 0:D]       = _one_hot_gather(idx[:, 0:1], node_tab)
    out_ref[0, :, D:2 * D]   = _one_hot_gather(idx[:, 1:2], edge_tab)
    out_ref[0, :, 2 * D:3 * D] = _one_hot_gather(idx[:, 2:3], node_tab)


def order_kernel(idx_ref, edge_tab_ref, out_ref):
    idx = idx_ref[0]                                   # (TN, 3) int32
    edge_tab = edge_tab_ref[...]
    out_ref[0, :, 0:D]       = _sin_cos_encoding(idx[:, 0:1].astype(jnp.float32), D)
    out_ref[0, :, D:2 * D]   = _one_hot_gather(idx[:, 1:2], edge_tab)
    out_ref[0, :, 2 * D:3 * D] = _sin_cos_encoding(idx[:, 2:3].astype(jnp.float32), D)


def value_kernel(h0_ref, eidx_ref, h2_ref, w_ref, b_ref, edge_tab_ref, out_ref):
    w = w_ref[...]                                     # (HIDDEN, D) bf16
    bias = b_ref[...]                                  # (1, D) f32
    # two bf16 matmuls (f32 accumulation), no VMEM-copying concat
    v0 = jnp.dot(h0_ref[0].astype(jnp.bfloat16), w,
                 preferred_element_type=jnp.float32) + bias
    v2 = jnp.dot(h2_ref[0].astype(jnp.bfloat16), w,
                 preferred_element_type=jnp.float32) + bias
    out_ref[0, :, 0:D]       = v0
    out_ref[0, :, D:2 * D]   = _one_hot_gather(eidx_ref[0], edge_tab_ref[...])
    out_ref[0, :, 2 * D:3 * D] = v2


# ----------------------------- pallas_call wrappers ---------------------------

def _params():
    return pltpu.CompilerParams(dimension_semantics=("parallel", "parallel"))


def _round_up(x, m):
    return ((x + m - 1) // m) * m


def _choose_tile(n, max_tile):
    """Tile TN (multiple of 8, <= max_tile) and padded N that is a TN multiple."""
    tn = min(max_tile, _round_up(n, 8))
    return tn, _round_up(n, tn)


def _pad_n(x, n_pad):
    n = x.shape[1]
    if n_pad == n:
        return x
    pad = [(0, 0)] * x.ndim
    pad[1] = (0, n_pad - n)
    return jnp.pad(x, pad)


def process_edge(edges, node_table, edge_table):
    """edges: int32 (B, N, 3) -> (B, N, 3, D) f32."""
    B, N, _ = edges.shape
    TN, Npad = _choose_tile(N, max_tile=1024)
    edges = _pad_n(edges, Npad)
    Vn = node_table.shape[0]
    Ve = edge_table.shape[0]
    out = pl.pallas_call(
        edge_kernel,
        out_shape=jax.ShapeDtypeStruct((B, Npad, 3 * D), jnp.float32),
        grid_spec=pltpu.PrefetchScalarGridSpec(
            num_scalar_prefetch=0,
            grid=(B, Npad // TN),
            in_specs=[
                pl.BlockSpec((1, TN, 3), lambda b, n: (b, n, 0)),
                pl.BlockSpec((Vn, D), lambda b, n: (0, 0)),
                pl.BlockSpec((Ve, D), lambda b, n: (0, 0)),
            ],
            out_specs=pl.BlockSpec((1, TN, 3 * D), lambda b, n: (b, n, 0)),
        ),
        compiler_params=_params(),
    )(edges, node_table, edge_table)
    return out[:, :N].reshape(B, N, 3, D)   # free trailing-dim split


def process_order(orders, edge_table):
    """orders: int32 (B, N, 3) -> (B, N, 3, D) f32."""
    B, N, _ = orders.shape
    TN, Npad = _choose_tile(N, max_tile=1024)
    orders = _pad_n(orders, Npad)
    Ve = edge_table.shape[0]
    out = pl.pallas_call(
        order_kernel,
        out_shape=jax.ShapeDtypeStruct((B, Npad, 3 * D), jnp.float32),
        grid_spec=pltpu.PrefetchScalarGridSpec(
            num_scalar_prefetch=0,
            grid=(B, Npad // TN),
            in_specs=[
                pl.BlockSpec((1, TN, 3), lambda b, n: (b, n, 0)),
                pl.BlockSpec((Ve, D), lambda b, n: (0, 0)),
            ],
            out_specs=pl.BlockSpec((1, TN, 3 * D), lambda b, n: (b, n, 0)),
        ),
        compiler_params=_params(),
    )(orders, edge_table)
    return out[:, :N].reshape(B, N, 3, D)


def process_value(h0, eidx, h2, proj_w_bf16, proj_b, edge_table):
    """h0/h2: f32 (B, N, 768); eidx: int32 (B, N) -> (B, N, 3, D) f32."""
    B, N, _ = h0.shape
    # TN capped at 512: double-buffered f32 CLS blocks ~6 MiB, fits every
    # generation's scoped VMEM default (16/32 MiB) with room to spare.
    TN, Npad = _choose_tile(N, max_tile=512)
    h0 = _pad_n(h0, Npad)
    h2 = _pad_n(h2, Npad)
    eidx = _pad_n(eidx[..., None], Npad)               # (B, Npad, 1)
    Ve = edge_table.shape[0]
    h_spec = pl.BlockSpec((1, TN, HIDDEN), lambda b, n: (b, n, 0))
    out = pl.pallas_call(
        value_kernel,
        out_shape=jax.ShapeDtypeStruct((B, Npad, 3 * D), jnp.float32),
        grid_spec=pltpu.PrefetchScalarGridSpec(
            num_scalar_prefetch=0,
            grid=(B, Npad // TN),
            in_specs=[
                h_spec,
                pl.BlockSpec((1, TN, 1), lambda b, n: (b, n, 0)),
                h_spec,
                pl.BlockSpec((HIDDEN, D), lambda b, n: (0, 0)),
                pl.BlockSpec((1, D), lambda b, n: (0, 0)),
                pl.BlockSpec((Ve, D), lambda b, n: (0, 0)),
            ],
            out_specs=pl.BlockSpec((1, TN, 3 * D), lambda b, n: (b, n, 0)),
        ),
        compiler_params=_params(),
    )(h0, eidx, h2, proj_w_bf16, proj_b, edge_table)
    return out[:, :N].reshape(B, N, 3, D)


# ------------------------------- GraphCreator --------------------------------

class GraphCreatorPallas:
    def __init__(self, node_dict, edge_dict, embedding_dim=128, key=None):
        assert embedding_dim == D
        self.num_nodes = len(node_dict)
        self.num_edge = len(edge_dict)
        key = jax.random.PRNGKey(0) if key is None else key
        k1, k2, k3, k4 = jax.random.split(key, 4)
        # nn.Embedding init ~ N(0,1)
        self.node_embedding = jax.random.normal(k1, (self.num_nodes, D), jnp.float32)
        self.edge_embedding = jax.random.normal(k2, (self.num_edge, D), jnp.float32)
        # ASTValueEmbedding.proj = nn.Linear(768, D): U(-1/sqrt(768), 1/sqrt(768))
        lim = 1.0 / math.sqrt(HIDDEN)
        self.proj_w = jax.random.uniform(k3, (HIDDEN, D), jnp.float32, -lim, lim)
        self.proj_b = jax.random.uniform(k4, (1, D), jnp.float32, -lim, lim)
        # bf16 copy of the projection weight for MXU-native matmul
        self.proj_w_bf16 = self.proj_w.astype(jnp.bfloat16)

    def __call__(self, edges, orders, values):
        """
        edges:  int32 (B, Ne, 3)  -- (node0_id, edge_type_id, node2_id)
        orders: int32 (B, No, 3)  -- (pos0, edge_type_id, pos2)
        values: tuple(cls0 f32 (B, Nv, 768), edge_type_id i32 (B, Nv),
                      cls2 f32 (B, Nv, 768))
        Returns three lists (length B) of (N, 3, D) arrays (one per group),
        mirroring process_edge / process_order / process_value of the module.
        """
        pe = process_edge(edges, self.node_embedding, self.edge_embedding)
        po = process_order(orders, self.edge_embedding)
        cls0, eidx, cls2 = values
        pv = process_value(cls0, eidx, cls2,
                           self.proj_w_bf16, self.proj_b, self.edge_embedding)
        # TODO(synk): the reference forward calls torch.mean() with no arguments
        # and never appends to its result lists (a bug); we return the per-group
        # processed tensors, which is the meaningful computation.
        return (list(pe), list(po), list(pv))


# ------------------------------ pure-JAX reference ----------------------------

def _ref_sincos(pos, d):
    pos = pos.astype(jnp.float32)[..., None]
    div = jnp.exp(jnp.arange(0, d, 2, dtype=jnp.float32) * (NEG_LOG_10000 / d))
    sin = jnp.sin(pos * div)
    cos = jnp.cos(pos * div)
    return jnp.stack([sin, cos], axis=-1).reshape(pos.shape[:-1] + (d,))


def _ref_edge(edges, node_tab, edge_tab):
    return jnp.stack([node_tab[edges[..., 0]],
                      edge_tab[edges[..., 1]],
                      node_tab[edges[..., 2]]], axis=2)


def _ref_order(orders, edge_tab):
    return jnp.stack([_ref_sincos(orders[..., 0], D),
                      edge_tab[orders[..., 1]],
                      _ref_sincos(orders[..., 2], D)], axis=2)


def _ref_value(cls0, eidx, cls2, w, b, edge_tab):
    hi = jax.lax.Precision.HIGHEST
    v0 = jnp.dot(cls0, w, precision=hi) + b
    v2 = jnp.dot(cls2, w, precision=hi) + b
    return jnp.stack([v0, edge_tab[eidx], v2], axis=2)


# ----------------------------------- main -------------------------------------

if __name__ == "__main__":
    B, N = 2, 8                       # 2 graphs, 8 edges/orders/values each
    node_dict = {i: f"node_{i}" for i in range(16)}
    edge_dict = {i: f"edge_{i}" for i in range(8)}

    key = jax.random.PRNGKey(0)
    k_model, k_e, k_o, k_v = jax.random.split(key, 4)
    model = GraphCreatorPallas(node_dict, edge_dict, embedding_dim=D, key=k_model)

    ke1, ke2, ke3 = jax.random.split(k_e, 3)
    edges = jnp.stack([
        jax.random.randint(ke1, (B, N), 0, 16),
        jax.random.randint(ke2, (B, N), 0, 8),
        jax.random.randint(ke3, (B, N), 0, 16),
    ], axis=-1).astype(jnp.int32)                         # (B, N, 3)

    ko1, ko2, ko3 = jax.random.split(k_o, 3)
    orders = jnp.stack([
        jax.random.randint(ko1, (B, N), 0, 100),
        jax.random.randint(ko2, (B, N), 0, 8),
        jax.random.randint(ko3, (B, N), 0, 100),
    ], axis=-1).astype(jnp.int32)                         # (B, N, 3)

    kv1, kv2, kv3 = jax.random.split(k_v, 3)
    cls0 = jax.random.normal(kv1, (B, N, HIDDEN), jnp.float32)  # synthetic CodeBERT CLS
    cls2 = jax.random.normal(kv2, (B, N, HIDDEN), jnp.float32)
    veidx = jax.random.randint(kv3, (B, N), 0, 8).astype(jnp.int32)

    pe, po, pv = model(edges, orders, (cls0, veidx, cls2))
    jax.block_until_ready((pe, po, pv))

    # correctness check against pure-JAX reference
    pe_arr = jnp.stack(pe)
    po_arr = jnp.stack(po)
    pv_arr = jnp.stack(pv)
    np.testing.assert_allclose(np.asarray(pe_arr),
                               np.asarray(_ref_edge(edges, model.node_embedding,
                                                    model.edge_embedding)),
                               rtol=1e-4, atol=1e-4)
    np.testing.assert_allclose(np.asarray(po_arr),
                               np.asarray(_ref_order(orders, model.edge_embedding)),
                               rtol=1e-3, atol=1e-3)
    # value path uses bf16 MXU inputs (f32 accumulation) -> looser tolerance
    np.testing.assert_allclose(np.asarray(pv_arr),
                               np.asarray(_ref_value(cls0, veidx, cls2, model.proj_w,
                                                     model.proj_b, model.edge_embedding)),
                               rtol=2e-2, atol=3e-2)

    print("KERNEL_OK")
</pallas_src>

<mosaic_0001>
module attributes {stable_mosaic.version = 11 : i64} {
  func.func @edge_kernel(%arg0: i32, %arg1: i32, %arg2: memref<1x8x3xi32, #tpu.memory_space<vmem>>, %arg3: memref<16x128xf32, #tpu.memory_space<vmem>>, %arg4: memref<8x128xf32, #tpu.memory_space<vmem>>, %arg5: memref<1x8x384xf32, #tpu.memory_space<vmem>>) attributes {dimension_semantics = [#tpu.dimension_semantics<parallel>, #tpu.dimension_semantics<parallel>], iteration_bounds = array<i64: 2, 1>, scalar_prefetch = 0 : i64, scratch_operands = 0 : i64, tpu.core_type = #tpu.core_type<tc>, window_params = [{transform_indices = @transform_0, window_bounds = array<i64: 1, 8, 3>}, {pipeline_mode = #tpu.pipeline_mode<synchronous>, transform_indices = @transform_1, window_bounds = array<i64: 16, 128>}, {pipeline_mode = #tpu.pipeline_mode<synchronous>, transform_indices = @transform_2, window_bounds = array<i64: 8, 128>}, {transform_indices = @transform_3, window_bounds = array<i64: 1, 8, 384>}]} {
    %c0 = arith.constant 0 : index
    %c0_0 = arith.constant 0 : index
    %c0_1 = arith.constant 0 : index
    %0 = vector.load %arg2[%c0, %c0_0, %c0_1] : memref<1x8x3xi32, #tpu.memory_space<vmem>>, vector<1x8x3xi32>
    %1 = vector.shape_cast %0 : vector<1x8x3xi32> to vector<8x3xi32>
    %c0_2 = arith.constant 0 : index
    %c0_3 = arith.constant 0 : index
    %2 = vector.load %arg3[%c0_2, %c0_3] : memref<16x128xf32, #tpu.memory_space<vmem>>, vector<16x128xf32>
    %c0_4 = arith.constant 0 : index
    %c0_5 = arith.constant 0 : index
    %3 = vector.load %arg4[%c0_4, %c0_5] : memref<8x128xf32, #tpu.memory_space<vmem>>, vector<8x128xf32>
    %4 = vector.extract_strided_slice %1 {offsets = [0, 0], sizes = [8, 1], strides = [1, 1]} : vector<8x3xi32> to vector<8x1xi32>
    %5 = tpu.iota {dimensions = array<i32: 1>} : vector<8x16xi32>
    %6 = vector.broadcast %4 : vector<8x1xi32> to vector<8x16xi32>
    %7 = arith.cmpi eq, %5, %6 : vector<8x16xi32>
    %8 = arith.extui %7 : vector<8x16xi1> to vector<8x16xi32>
    %9 = arith.sitofp %8 : vector<8x16xi32> to vector<8x16xf32>
    %cst = arith.constant dense<0.000000e+00> : vector<8x128xf32>
    %10 = tpu.matmul %9, %2, %cst {dimension_numbers = #tpu.dot_dimension_numbers<[1], [0], [0], [1], [0, 0, 1, 1], [], []>, precision = #tpu.contract_precision<fp32>} : vector<8x16xf32>, vector<16x128xf32>, vector<8x128xf32> -> vector<8x128xf32>
    %c0_6 = arith.constant 0 : index
    %c0_7 = arith.constant 0 : index
    %c0_8 = arith.constant 0 : index
    %11 = vector.load %arg5[%c0_6, %c0_7, %c0_8] : memref<1x8x384xf32, #tpu.memory_space<vmem>>, vector<1x8x128xf32>
    %12 = vector.shape_cast %11 : vector<1x8x128xf32> to vector<8x128xf32>
    %13 = vector.shape_cast %10 : vector<8x128xf32> to vector<1x8x128xf32>
    tpu.vector_store %arg5[%c0_6, %c0_7, %c0_8], %13 {strides = array<i32>} : memref<1x8x384xf32, #tpu.memory_space<vmem>>, vector<1x8x128xf32>,
    %14 = vector.extract_strided_slice %1 {offsets = [0, 1], sizes = [8, 1], strides = [1, 1]} : vector<8x3xi32> to vector<8x1xi32>
    %15 = tpu.iota {dimensions = array<i32: 1>} : vector<8x8xi32>
    %16 = vector.broadcast %14 : vector<8x1xi32> to vector<8x8xi32>
    %17 = arith.cmpi eq, %15, %16 : vector<8x8xi32>
    %18 = arith.extui %17 : vector<8x8xi1> to vector<8x8xi32>
    %19 = arith.sitofp %18 : vector<8x8xi32> to vector<8x8xf32>
    %cst_9 = arith.constant dense<0.000000e+00> : vector<8x128xf32>
    %20 = tpu.matmul %19, %3, %cst_9 {dimension_numbers = #tpu.dot_dimension_numbers<[1], [0], [0], [1], [0, 0, 1, 1], [], []>, precision = #tpu.contract_precision<fp32>} : vector<8x8xf32>, vector<8x128xf32>, vector<8x128xf32> -> vector<8x128xf32>
    %c0_10 = arith.constant 0 : index
    %c0_11 = arith.constant 0 : index
    %c128 = arith.constant 128 : index
    %21 = vector.load %arg5[%c0_10, %c0_11, %c128] : memref<1x8x384xf32, #tpu.memory_space<vmem>>, vector<1x8x128xf32>
    %22 = vector.shape_cast %21 : vector<1x8x128xf32> to vector<8x128xf32>
    %23 = vector.shape_cast %20 : vector<8x128xf32> to vector<1x8x128xf32>
    tpu.vector_store %arg5[%c0_10, %c0_11, %c128], %23 {strides = array<i32>} : memref<1x8x384xf32, #tpu.memory_space<vmem>>, vector<1x8x128xf32>,
    %24 = vector.extract_strided_slice %1 {offsets = [0, 2], sizes = [8, 1], strides = [1, 1]} : vector<8x3xi32> to vector<8x1xi32>
    %25 = tpu.iota {dimensions = array<i32: 1>} : vector<8x16xi32>
    %26 = vector.broadcast %24 : vector<8x1xi32> to vector<8x16xi32>
    %27 = arith.cmpi eq, %25, %26 : vector<8x16xi32>
    %28 = arith.extui %27 : vector<8x16xi1> to vector<8x16xi32>
    %29 = arith.sitofp %28 : vector<8x16xi32> to vector<8x16xf32>
    %cst_12 = arith.constant dense<0.000000e+00> : vector<8x128xf32>
    %30 = tpu.matmul %29, %2, %cst_12 {dimension_numbers = #tpu.dot_dimension_numbers<[1], [0], [0], [1], [0, 0, 1, 1], [], []>, precision = #tpu.contract_precision<fp32>} : vector<8x16xf32>, vector<16x128xf32>, vector<8x128xf32> -> vector<8x128xf32>
    %c0_13 = arith.constant 0 : index
    %c0_14 = arith.constant 0 : index
    %c256 = arith.constant 256 : index
    %31 = vector.load %arg5[%c0_13, %c0_14, %c256] : memref<1x8x384xf32, #tpu.memory_space<vmem>>, vector<1x8x128xf32>
    %32 = vector.shape_cast %31 : vector<1x8x128xf32> to vector<8x128xf32>
    %33 = vector.shape_cast %30 : vector<8x128xf32> to vector<1x8x128xf32>
    tpu.vector_store %arg5[%c0_13, %c0_14, %c256], %33 {strides = array<i32>} : memref<1x8x384xf32, #tpu.memory_space<vmem>>, vector<1x8x128xf32>,
    return
  }
  func.func @transform_0(%arg0: i32, %arg1: i32) -> (i32, i32, i32) {
    %c0_i32 = arith.constant 0 : i32
    %c0_i32_0 = arith.constant 0 : i32
    return %arg0, %arg1, %c0_i32 : i32, i32, i32
  }
  func.func @transform_1(%arg0: i32, %arg1: i32) -> (i32, i32) {
    %c0_i32 = arith.constant 0 : i32
    %c0_i32_0 = arith.constant 0 : i32
    %c0_i32_1 = arith.constant 0 : i32
    return %c0_i32, %c0_i32_0 : i32, i32
  }
  func.func @transform_2(%arg0: i32, %arg1: i32) -> (i32, i32) {
    %c0_i32 = arith.constant 0 : i32
    %c0_i32_0 = arith.constant 0 : i32
    %c0_i32_1 = arith.constant 0 : i32
    return %c0_i32, %c0_i32_0 : i32, i32
  }
  func.func @transform_3(%arg0: i32, %arg1: i32) -> (i32, i32, i32) {
    %c0_i32 = arith.constant 0 : i32
    %c0_i32_0 = arith.constant 0 : i32
    return %arg0, %arg1, %c0_i32 : i32, i32, i32
  }
}

</mosaic_0001>

<llo_original>
// kernel: tpu_custom_call.1
$region0: #{tpu_custom_call.1}
  #allocation0 [shape = 'u32[]', space=smem, size = 0x4, offset = 0x4, fixed_abs, tag = 'smem constant byte address 0x4 - core index']
  #allocation1 [shape = 'u32[144,128]{1,0:T(1,128)}', space=vmem, size = 0x12000, scoped, tag = 'internal scratch']
  %s0 = inlined_call_operand.vmem [shape: s32[2,8,3], index: 0, kind: input, shape index: {}]
  %s1 = inlined_call_operand.vmem [shape: f32[16,128], index: 1, kind: input, shape index: {}]
  %s2 = inlined_call_operand.vmem [shape: f32[8,128], index: 2, kind: input, shape index: {}]
  %s3 = inlined_call_operand.hbm [shape: f32[2,8,384], index: 3, kind: output, shape index: {}]
  %s4 = sld [smem:[#allocation0]]
  $region45: #{tpu_custom_call.1} parent=0
    _
  %s6 = ssub.s32 1, %s4
  %s7 = scalar_select 0, %s6, %s4
  $region1: #{tpu_custom_call.1} parent=0
    #allocation2 [shape = 'u8[24576]{0}', space=vmem, size = 0x6000, scoped, tag = 'output window, operand 0']
    #allocation3 [shape = 's32[2]{0}', space=sflag, size = 0x8, scoped, tag = 'scoped memory for tpu_custom_call.1']
    %8 = vsyncpa [#allocation3], 0
    %s9 = scalar_lea.sflag [#allocation3], 1
    %10 = vsyncpa %s9, 0
    loop: start=0, step=1, limit=4
    $region2: #{tpu_custom_call.1} parent=1 // loop_pre_header
      _
    $region3: #{tpu_custom_call.1} parent=1 // loop_header
      %s12 = sphi 0, %s16
      %p13 = scmp.ge.s32.totalorder %s12, 4
      %s19 = sphi 0, %s31
      %s20 = sphi 0, %s27
      %s21 = sphi 0, %s19
      %s22 = sphi 0, %s20
      %s23 = sphi 0, %s21
      %s24 = sphi 0, %s22
      %s36 = sphi 0, %s38
      %s39 = sphi 0, %s36
      %s40 = sphi 0, %s39
      %s56 = sphi 0, %s40
      %s60 = sphi 0, %s60
      %s62 = sphi 0, %s60
      %s63 = sphi 0, %s62
      %s77 = sphi 0, %s63
      %s81 = sphi 0, %s81
      %s83 = sphi 0, %s81
      %s84 = sphi 0, %s83
      %s98 = sphi 0, %s84
      %s106 = sphi 0, %s108
      %s109 = sphi 0, %s106
      %s110 = sphi 0, %s109
      %s126 = sphi 0, %s110
    $region4: #{tpu_custom_call.1} parent=1 // loop_header_branch
      %15 = sbr.rel (%p13) target = $region8
    $region5: #{tpu_custom_call.1} parent=1 // loop_body
      %s17 = ssub.s32 %s12, 1
      %s18 = ssub.s32 %s12, 2
      %s25 = sadd.s32 1, %s20
      %p26 = scmp.ge.s32.totalorder %s25, 1
      %s27 = scalar_select %p26, 0, %s25
      %s28 = sadd.s32 1, %s19
      %s29 = scalar_select %p26, %s28, %s19
      %p30 = scmp.ge.s32.totalorder %s29, 2
      %s31 = scalar_select %p30, 0, %s29
      %s32 = ssub.s32 %s19, %s31
      %s33 = ssub.s32 %s20, %s27
      %s34 = sor.u32 %s32, %s33
      %p35 = scmp.eq.s32.totalorder %s34, 0
      %s37 = sadd.s32 %s36, 1
      %s38 = scalar_select %p35, %s36, %s37
      %p41 = pneg %p35
      %p42 = scmp.eq.s32.totalorder %s12, 1
      %p43 = por %p41, %p42
      %p44 = scmp.ne.s32.totalorder %s36, %s39
      %p45 = scmp.eq.s32.totalorder %s12, 0
      %p46 = por %p44, %p45
      %p47 = scmp.ne.s32.totalorder %s36, %s39
      %p48 = scmp.eq.s32.totalorder %s17, 1
      %p49 = por %p47, %p48
      %p50 = scmp.ne.s32.totalorder %s39, %s40
      %p51 = scmp.eq.s32.totalorder %s17, 0
      %p52 = por %p50, %p51
      %p53 = scmp.ne.s32.totalorder %s39, %s40
      %p54 = scmp.eq.s32.totalorder %s18, 1
      %p55 = por %p53, %p54
      %p57 = scmp.ne.s32.totalorder %s40, %s56
      %p58 = scmp.eq.s32.totalorder %s18, 0
      %p59 = por %p57, %p58
      %s61 = sadd.s32 %s60, 1
      %p64 = scmp.eq.s32.totalorder %s12, 1
      %p65 = scmp.ne.s32.totalorder %s60, %s62
      %p66 = scmp.eq.s32.totalorder %s12, 0
      %p67 = por %p65, %p66
      %p68 = scmp.ne.s32.totalorder %s60, %s62
      %p69 = scmp.eq.s32.totalorder %s17, 1
      %p70 = por %p68, %p69
      %p71 = scmp.ne.s32.totalorder %s62, %s63
      %p72 = scmp.eq.s32.totalorder %s17, 0
      %p73 = por %p71, %p72
      %p74 = scmp.ne.s32.totalorder %s62, %s63
      %p75 = scmp.eq.s32.totalorder %s18, 1
      %p76 = por %p74, %p75
      %p78 = scmp.ne.s32.totalorder %s63, %s77
      %p79 = scmp.eq.s32.totalorder %s18, 0
      %p80 = por %p78, %p79
      %s82 = sadd.s32 %s81, 1
      %p85 = scmp.eq.s32.totalorder %s12, 1
      %p86 = scmp.ne.s32.totalorder %s81, %s83
      %p87 = scmp.eq.s32.totalorder %s12, 0
      %p88 = por %p86, %p87
      %p89 = scmp.ne.s32.totalorder %s81, %s83
      %p90 = scmp.eq.s32.totalorder %s17, 1
      %p91 = por %p89, %p90
      %p92 = scmp.ne.s32.totalorder %s83, %s84
      %p93 = scmp.eq.s32.totalorder %s17, 0
      %p94 = por %p92, %p93
      %p95 = scmp.ne.s32.totalorder %s83, %s84
      %p96 = scmp.eq.s32.totalorder %s18, 1
      %p97 = por %p95, %p96
      %p99 = scmp.ne.s32.totalorder %s84, %s98
      %p100 = scmp.eq.s32.totalorder %s18, 0
      %p101 = por %p99, %p100
      %s102 = ssub.s32 %s19, %s31
      %s103 = ssub.s32 %s20, %s27
      %s104 = sor.u32 %s102, %s103
      %p105 = scmp.eq.s32.totalorder %s104, 0
      %s107 = sadd.s32 %s106, 1
      %s108 = scalar_select %p105, %s106, %s107
      %p111 = pneg %p105
      %p112 = scmp.eq.s32.totalorder %s12, 1
      %p113 = por %p111, %p112
      %p114 = scmp.ne.s32.totalorder %s106, %s109
      %p115 = scmp.eq.s32.totalorder %s12, 0
      %p116 = por %p114, %p115
      %p117 = scmp.ne.s32.totalorder %s106, %s109
      %p118 = scmp.eq.s32.totalorder %s17, 1
      %p119 = por %p117, %p118
      %p120 = scmp.ne.s32.totalorder %s109, %s110
      %p121 = scmp.eq.s32.totalorder %s17, 0
      %p122 = por %p120, %p121
      %p123 = scmp.ne.s32.totalorder %s109, %s110
      %p124 = scmp.eq.s32.totalorder %s18, 1
      %p125 = por %p123, %p124
      %p127 = scmp.ne.s32.totalorder %s110, %s126
      %p128 = scmp.eq.s32.totalorder %s18, 0
      %p129 = por %p127, %p128
      %p130 = scmp.le.s32.totalorder 1, %s12
      %p131 = scmp.lt.s32.totalorder %s12, 3
      %p132 = pnand %p130, %p131
      %p133 = pneg %p132
      // Predicated region
      $region9: #{tpu_custom_call.1} parent=5 // pred_check
        _
      $region10: #{tpu_custom_call.1} parent=5 // pred_check_branch
        %135 = sbr.rel (%p132) target = $region12
      $region11: #{tpu_custom_call.1} parent=5 // pred_region
        %s136 = ssub.s32 %s12, 1
        // Predicated region
        $region13: #{tpu_custom_call.1} parent=11 // pred_check
          %p137 = pneg %p73
        $region14: #{tpu_custom_call.1} parent=11 // pred_check_branch
          %139 = sbr.rel (%p137) target = $region16
        $region15: #{tpu_custom_call.1} parent=11 // pred_region
          _
        $region16: #{tpu_custom_call.1} parent=11 // pred_fallthru
          _
        // Predicated region
        $region17: #{tpu_custom_call.1} parent=11 // pred_check
          %p140 = pneg %p94
        $region18: #{tpu_custom_call.1} parent=11 // pred_check_branch
          %142 = sbr.rel (%p140) target = $region20
        $region19: #{tpu_custom_call.1} parent=11 // pred_region
          _
        $region20: #{tpu_custom_call.1} parent=11 // pred_fallthru
          _
      $region12: #{tpu_custom_call.1} parent=5 // pred_fallthru
        _
      %p143 = scmp.lt.s32.totalorder %s12, 2
      // Predicated region
      $region21: #{tpu_custom_call.1} parent=5 // pred_check
        %p144 = pneg %p143
      $region22: #{tpu_custom_call.1} parent=5 // pred_check_branch
        %146 = sbr.rel (%p144) target = $region24
      $region23: #{tpu_custom_call.1} parent=5 // pred_region
        // Predicated region
        $region25: #{tpu_custom_call.1} parent=23 // pred_check
          %p147 = pneg %p46
        $region26: #{tpu_custom_call.1} parent=23 // pred_check_branch
          %149 = sbr.rel (%p147) target = $region28
        $region27: #{tpu_custom_call.1} parent=23 // pred_region
          %p150 = scmp.lt.s32.totalorder %s19, 1
          %s151 = scalar_select %p150, %s19, 1
          %p152 = scmp.lt.s32.totalorder %s20, 0
          %s153 = scalar_select %p152, %s20, 0
          %s154 = sadd.s32 %s153, %s151
          %s155 = smul.addr %s154, 8
          %s156 = scalar_lea.vmem %s0, %s155
        $region28: #{tpu_custom_call.1} parent=23 // pred_fallthru
          _
      $region24: #{tpu_custom_call.1} parent=5 // pred_fallthru
        _
      %p157 = scmp.le.s32.totalorder 1, %s12
      %p158 = scmp.lt.s32.totalorder %s12, 3
      %p159 = pnand %p157, %p158
      %p160 = pneg %p159
      // Predicated region
      $region29: #{tpu_custom_call.1} parent=5 // pred_check
        _
      $region30: #{tpu_custom_call.1} parent=5 // pred_check_branch
        %162 = sbr.rel (%p159) target = $region32
      $region31: #{tpu_custom_call.1} parent=5 // pred_region
        %s163 = ssub.s32 %s12, 1
        %p164 = scmp.lt.s32.totalorder %s21, 1
        %s165 = scalar_select %p164, %s21, 1
        %p166 = scmp.lt.s32.totalorder %s22, 0
        %s167 = scalar_select %p166, %s22, 0
        %s168 = sadd.s32 %s167, %s165
        %s169 = smul.addr %s168, 8
        %s170 = scalar_lea.vmem %s0, %s169
        %p171 = pneg %p52
        %p172 = pneg %p49
        %p173 = pneg %p73
        %p174 = pneg %p70
        %p175 = pneg %p94
        %p176 = pneg %p91
        %p177 = pneg %p122
        %p178 = pneg %p119
        %s179 = sand.u32 %s109, 1
        %s180 = scalar_lea.sflag [#allocation3], %s179
        %s181 = sand.u32 %s109, 1
        %s182 = smul.addr %s181, 24
        %s183 = scalar_lea.vmem [#allocation2], %s182
        %p184 = scmp.lt.s32.totalorder %s21, 1
        %s185 = scalar_select %p184, %s21, 1
        %p186 = scmp.lt.s32.totalorder %s22, 0
        %s187 = scalar_select %p186, %s22, 0
        %s188 = sadd.s32 %s187, %s185
        %s189 = smul.addr %s188, 8
        %s190 = scalar_lea.vmem %s0, %s189
        %v191 = vld [vmem:[%s190] sm:$0xff]
        %v192 = vld [vmem:[%s1] sm:$0xff]
        %v193 = vld [vmem:[%s1 + $0x8] sm:$0xff]
        %v194 = vld [vmem:[%s2] sm:$0xff]
        %v195 = vlaneseq
        %v196 = vand.u32 %v195, 127
        %197 = vset.pattern.permute.xlu0 0
        %198 = vperm.xlu0 %197, %v191
        %v199 = vpop.permute.xlu0 %198
        %vm200 = vcmp.eq.s32.totalorder %v196, %v199
        %v201 = vsel %vm200, 1, 0
        %v202 = vcvt.s32.f32 %v201
        %vm203 = vcmask 130048
        %v205 = vsel %vm203, %v202, 0
        %207 = vmatprep.subr.mxu0 0.0
        %v208 = vand.u32 %v192, 4294901760
        %209 = vmatpush1.msra.mxu0 %v208
        %210 = vmatprep.subr.mxu0 0.0
        %v211 = vand.u32 %v193, 4294901760
        %212 = vmatpush1.msra.mxu0 %v211
        %213 = vmatprep.subr.mxu0 0.0
        %214 = vmatpush1.msra.mxu0 0.0
        %215 = vmatprep.subr.mxu0 0.0
        %216 = vmatpush1.msra.mxu0 0.0
        %217 = vmatprep.subr.mxu0 0.0
        %218 = vmatpush1.msra.mxu0 0.0
        %219 = vmatprep.subr.mxu0 0.0
        %220 = vmatpush1.msra.mxu0 0.0
        %221 = vmatprep.subr.mxu0 0.0
        %222 = vmatpush1.msra.mxu0 0.0
        %223 = vmatprep.subr.mxu0 0.0
        %224 = vmatpush1.msra.mxu0 0.0
        %225 = vmatprep.subr.mxu0 0.0
        %226 = vmatpush1.msra.mxu0 0.0
        %227 = vmatprep.subr.mxu0 0.0
        %228 = vmatpush1.msra.mxu0 0.0
        %229 = vmatprep.subr.mxu0 0.0
        %230 = vmatpush1.msra.mxu0 0.0
        %231 = vmatprep.subr.mxu0 0.0
        %232 = vmatpush1.msra.mxu0 0.0
        %233 = vmatprep.subr.mxu0 0.0
        %234 = vmatpush1.msra.mxu0 0.0
        %235 = vmatprep.subr.mxu0 0.0
        %236 = vmatpush1.msra.mxu0 0.0
        %237 = vmatprep.subr.mxu0 0.0
        %238 = vmatpush1.msra.mxu0 0.0
        %239 = vmatprep.subr.mxu0 0.0
        %240 = vmatpush1.msra.mxu0 0.0
        %241 = vmatprep.subr.mxu0 0.0
        %242 = vmatpush1.msra.mxu0 0.0
        %243 = vmatprep.subr.mxu0 0.0
        %244 = vmatpush1.msra.mxu0 0.0
        %245 = vmatprep.subr.mxu0 0.0
        %246 = vmatpush1.msra.mxu0 0.0
        %247 = vmatprep.subr.mxu0 0.0
        %248 = vmatpush1.msra.mxu0 0.0
        %249 = vmatprep.subr.mxu0 0.0
        %250 = vmatpush1.msra.mxu0 0.0
        %251 = vmatprep.subr.mxu0 0.0
        %252 = vmatpush1.msra.mxu0 0.0
        %253 = vmatprep.subr.mxu0 0.0
        %254 = vmatpush1.msra.mxu0 0.0
        %255 = vmatprep.subr.mxu0 0.0
        %256 = vmatpush1.msra.mxu0 0.0
        %257 = vmatprep.subr.mxu0 0.0
        %258 = vmatpush1.msra.mxu0 0.0
        %259 = vmatprep.subr.mxu0 0.0
        %260 = vmatpush1.msra.mxu0 0.0
        %261 = vmatprep.subr.mxu0 0.0
        %262 = vmatpush1.msra.mxu0 0.0
        %263 = vmatprep.subr.mxu0 0.0
        %264 = vmatpush1.msra.mxu0 0.0
        %265 = vmatprep.subr.mxu0 0.0
        %266 = vmatpush1.msra.mxu0 0.0
        %267 = vmatprep.subr.mxu0 0.0
        %268 = vmatpush1.msra.mxu0 0.0
        %269 = vmatprep.subr.mxu0 0.0
        %270 = vmatpush1.msra.mxu0 0.0
        %271 = vmatprep.subr.mxu0 0.0
        %272 = vmatpush1.msra.mxu0 0.0
        %273 = vmatprep.mubr.f32.mxu0 0.0
        %v274 = vand.u32 %v205, 4294901760
        %v275 = vsub.f32 %v205, %v274
        %v276 = vand.u32 %v275, 4294901760
        %v277 = vsub.f32 %v275, %v276
        %v278 = vand.u32 %v277, 4294901760
        %279 = vmatmul.mubr.f32.gmra.mrb[0].mxu0 %v278
        %v280 = vpop.f32.mrb[0].mxu0
        %v281 = vadd.f32 0.0, %v280
        %v282 = vpop.f32.mrb[0].mxu0
        %283 = vdwg.mxu0
        %284 = vmatprep.subr.mxu0 0.0
        %v285 = vand.u32 %v192, 4294901760
        %v286 = vsub.f32 %v192, %v285
        %v287 = vand.u32 %v286, 4294901760
        %v288 = vsub.f32 %v286, %v287
        %v289 = vand.u32 %v288, 4294901760
        %290 = vmatpush1.msra.mxu0 %v289
        %291 = vmatprep.subr.mxu0 0.0
        %v292 = vand.u32 %v193, 4294901760
        %v293 = vsub.f32 %v193, %v292
        %v294 = vand.u32 %v293, 4294901760
        %v295 = vsub.f32 %v293, %v294
        %v296 = vand.u32 %v295, 4294901760
        %297 = vmatpush1.msra.mxu0 %v296
        %298 = vmatprep.subr.mxu0 0.0
        %299 = vmatpush1.msra.mxu0 0.0
        %300 = vmatprep.subr.mxu0 0.0
        %301 = vmatpush1.msra.mxu0 0.0
        %302 = vmatprep.subr.mxu0 0.0
        %303 = vmatpush1.msra.mxu0 0.0
        %304 = vmatprep.subr.mxu0 0.0
        %305 = vmatpush1.msra.mxu0 0.0
        %306 = vmatprep.subr.mxu0 0.0
        %307 = vmatpush1.msra.mxu0 0.0
        %308 = vmatprep.subr.mxu0 0.0
        %309 = vmatpush1.msra.mxu0 0.0
        %310 = vmatprep.subr.mxu0 0.0
        %311 = vmatpush1.msra.mxu0 0.0
        %312 = vmatprep.subr.mxu0 0.0
        %313 = vmatpush1.msra.mxu0 0.0
        %314 = vmatprep.subr.mxu0 0.0
        %315 = vmatpush1.msra.mxu0 0.0
        %316 = vmatprep.subr.mxu0 0.0
        %317 = vmatpush1.msra.mxu0 0.0
        %318 = vmatprep.subr.mxu0 0.0
        %319 = vmatpush1.msra.mxu0 0.0
        %320 = vmatprep.subr.mxu0 0.0
        %321 = vmatpush1.msra.mxu0 0.0
        %322 = vmatprep.subr.mxu0 0.0
        %323 = vmatpush1.msra.mxu0 0.0
        %324 = vmatprep.subr.mxu0 0.0
        %325 = vmatpush1.msra.mxu0 0.0
        %326 = vmatprep.subr.mxu0 0.0
        %327 = vmatpush1.msra.mxu0 0.0
        %328 = vmatprep.subr.mxu0 0.0
        %329 = vmatpush1.msra.mxu0 0.0
        %330 = vmatprep.subr.mxu0 0.0
        %331 = vmatpush1.msra.mxu0 0.0
        %332 = vmatprep.subr.mxu0 0.0
        %333 = vmatpush1.msra.mxu0 0.0
        %334 = vmatprep.subr.mxu0 0.0
        %335 = vmatpush1.msra.mxu0 0.0
        %336 = vmatprep.subr.mxu0 0.0
        %337 = vmatpush1.msra.mxu0 0.0
        %338 = vmatprep.subr.mxu0 0.0
        %339 = vmatpush1.msra.mxu0 0.0
        %340 = vmatprep.subr.mxu0 0.0
        %341 = vmatpush1.msra.mxu0 0.0
        %342 = vmatprep.subr.mxu0 0.0
        %343 = vmatpush1.msra.mxu0 0.0
        %344 = vmatprep.subr.mxu0 0.0
        %345 = vmatpush1.msra.mxu0 0.0
        %346 = vmatprep.subr.mxu0 0.0
        %347 = vmatpush1.msra.mxu0 0.0
        %348 = vmatprep.subr.mxu0 0.0
        %349 = vmatpush1.msra.mxu0 0.0
        %350 = vmatprep.subr.mxu0 0.0
        %351 = vmatpush1.msra.mxu0 0.0
        %352 = vmatprep.subr.mxu0 0.0
        %353 = vmatpush1.msra.mxu0 0.0
        %354 = vmatprep.subr.mxu0 0.0
        %355 = vmatpush1.msra.mxu0 0.0
        %356 = vmatprep.subr.mxu0 0.0
        %357 = vmatpush1.msra.mxu0 0.0
        %358 = vmatprep.mubr.f32.mxu0 0.0
        %v359 = vand.u32 %v205, 4294901760
        %360 = vmatmul.mubr.f32.gmra.mrb[0].mxu0 %v359
        %v361 = vpop.f32.mrb[0].mxu0
        %v362 = vadd.f32 %v281, %v361
        %v363 = vpop.f32.mrb[0].mxu0
        %364 = vdwg.mxu0
        %365 = vmatprep.subr.mxu0 0.0
        %v366 = vand.u32 %v192, 4294901760
        %v367 = vsub.f32 %v192, %v366
        %368 = vmatpush1.msra.mxu0 %v367
        %369 = vmatprep.subr.mxu0 0.0
        %v370 = vand.u32 %v193, 4294901760
        %v371 = vsub.f32 %v193, %v370
        %372 = vmatpush1.msra.mxu0 %v371
        %373 = vmatprep.subr.mxu0 0.0
        %374 = vmatpush1.msra.mxu0 0.0
        %375 = vmatprep.subr.mxu0 0.0
        %376 = vmatpush1.msra.mxu0 0.0
        %377 = vmatprep.subr.mxu0 0.0
        %378 = vmatpush1.msra.mxu0 0.0
        %379 = vmatprep.subr.mxu0 0.0
        %380 = vmatpush1.msra.mxu0 0.0
        %381 = vmatprep.subr.mxu0 0.0
        %382 = vmatpush1.msra.mxu0 0.0
        %383 = vmatprep.subr.mxu0 0.0
        %384 = vmatpush1.msra.mxu0 0.0
        %385 = vmatprep.subr.mxu0 0.0
        %386 = vmatpush1.msra.mxu0 0.0
        %387 = vmatprep.subr.mxu0 0.0
        %388 = vmatpush1.msra.mxu0 0.0
        %389 = vmatprep.subr.mxu0 0.0
        %390 = vmatpush1.msra.mxu0 0.0
        %391 = vmatprep.subr.mxu0 0.0
        %392 = vmatpush1.msra.mxu0 0.0
        %393 = vmatprep.subr.mxu0 0.0
        %394 = vmatpush1.msra.mxu0 0.0
        %395 = vmatprep.subr.mxu0 0.0
        %396 = vmatpush1.msra.mxu0 0.0
        %397 = vmatprep.subr.mxu0 0.0
        %398 = vmatpush1.msra.mxu0 0.0
        %399 = vmatprep.subr.mxu0 0.0
        %400 = vmatpush1.msra.mxu0 0.0
        %401 = vmatprep.subr.mxu0 0.0
        %402 = vmatpush1.msra.mxu0 0.0
        %403 = vmatprep.subr.mxu0 0.0
        %404 = vmatpush1.msra.mxu0 0.0
        %405 = vmatprep.subr.mxu0 0.0
        %406 = vmatpush1.msra.mxu0 0.0
        %407 = vmatprep.subr.mxu0 0.0
        %408 = vmatpush1.msra.mxu0 0.0
        %409 = vmatprep.subr.mxu0 0.0
        %410 = vmatpush1.msra.mxu0 0.0
        %411 = vmatprep.subr.mxu0 0.0
        %412 = vmatpush1.msra.mxu0 0.0
        %413 = vmatprep.subr.mxu0 0.0
        %414 = vmatpush1.msra.mxu0 0.0
        %415 = vmatprep.subr.mxu0 0.0
        %416 = vmatpush1.msra.mxu0 0.0
        %417 = vmatprep.subr.mxu0 0.0
        %418 = vmatpush1.msra.mxu0 0.0
        %419 = vmatprep.subr.mxu0 0.0
        %420 = vmatpush1.msra.mxu0 0.0
        %421 = vmatprep.subr.mxu0 0.0
        %422 = vmatpush1.msra.mxu0 0.0
        %423 = vmatprep.subr.mxu0 0.0
        %424 = vmatpush1.msra.mxu0 0.0
        %425 = vmatprep.subr.mxu0 0.0
        %426 = vmatpush1.msra.mxu0 0.0
        %427 = vmatprep.subr.mxu0 0.0
        %428 = vmatpush1.msra.mxu0 0.0
        %429 = vmatprep.subr.mxu0 0.0
        %430 = vmatpush1.msra.mxu0 0.0
        %431 = vmatprep.subr.mxu0 0.0
        %432 = vmatpush1.msra.mxu0 0.0
        %433 = vmatprep.mubr.f32.mxu0 0.0
        %v434 = vand.u32 %v205, 4294901760
        %v435 = vsub.f32 %v205, %v434
        %436 = vmatmul.mubr.f32.gmra.mrb[0].mxu0 %v435
        %v437 = vpop.f32.mrb[0].mxu0
        %v438 = vadd.f32 %v362, %v437
        %v439 = vpop.f32.mrb[0].mxu0
        %440 = vdwg.mxu0
        %441 = vmatprep.subr.mxu0 0.0
        %v442 = vand.u32 %v192, 4294901760
        %443 = vmatpush1.msra.mxu0 %v442
        %444 = vmatprep.subr.mxu0 0.0
        %v445 = vand.u32 %v193, 4294901760
        %446 = vmatpush1.msra.mxu0 %v445
        %447 = vmatprep.subr.mxu0 0.0
        %448 = vmatpush1.msra.mxu0 0.0
        %449 = vmatprep.subr.mxu0 0.0
        %450 = vmatpush1.msra.mxu0 0.0
        %451 = vmatprep.subr.mxu0 0.0
        %452 = vmatpush1.msra.mxu0 0.0
        %453 = vmatprep.subr.mxu0 0.0
        %454 = vmatpush1.msra.mxu0 0.0
        %455 = vmatprep.subr.mxu0 0.0
        %456 = vmatpush1.msra.mxu0 0.0
        %457 = vmatprep.subr.mxu0 0.0
        %458 = vmatpush1.msra.mxu0 0.0
        %459 = vmatprep.subr.mxu0 0.0
        %460 = vmatpush1.msra.mxu0 0.0
        %461 = vmatprep.subr.mxu0 0.0
        %462 = vmatpush1.msra.mxu0 0.0
        %463 = vmatprep.subr.mxu0 0.0
        %464 = vmatpush1.msra.mxu0 0.0
        %465 = vmatprep.subr.mxu0 0.0
        %466 = vmatpush1.msra.mxu0 0.0
        %467 = vmatprep.subr.mxu0 0.0
        %468 = vmatpush1.msra.mxu0 0.0
        %469 = vmatprep.subr.mxu0 0.0
        %470 = vmatpush1.msra.mxu0 0.0
        %471 = vmatprep.subr.mxu0 0.0
        %472 = vmatpush1.msra.mxu0 0.0
        %473 = vmatprep.subr.mxu0 0.0
        %474 = vmatpush1.msra.mxu0 0.0
        %475 = vmatprep.subr.mxu0 0.0
        %476 = vmatpush1.msra.mxu0 0.0
        %477 = vmatprep.subr.mxu0 0.0
        %478 = vmatpush1.msra.mxu0 0.0
        %479 = vmatprep.subr.mxu0 0.0
        %480 = vmatpush1.msra.mxu0 0.0
        %481 = vmatprep.subr.mxu0 0.0
        %482 = vmatpush1.msra.mxu0 0.0
        %483 = vmatprep.subr.mxu0 0.0
        %484 = vmatpush1.msra.mxu0 0.0
        %485 = vmatprep.subr.mxu0 0.0
        %486 = vmatpush1.msra.mxu0 0.0
        %487 = vmatprep.subr.mxu0 0.0
        %488 = vmatpush1.msra.mxu0 0.0
        %489 = vmatprep.subr.mxu0 0.0
        %490 = vmatpush1.msra.mxu0 0.0
        %491 = vmatprep.subr.mxu0 0.0
        %492 = vmatpush1.msra.mxu0 0.0
        %493 = vmatprep.subr.mxu0 0.0
        %494 = vmatpush1.msra.mxu0 0.0
        %495 = vmatprep.subr.mxu0 0.0
        %496 = vmatpush1.msra.mxu0 0.0
        %497 = vmatprep.subr.mxu0 0.0
        %498 = vmatpush1.msra.mxu0 0.0
        %499 = vmatprep.subr.mxu0 0.0
        %500 = vmatpush1.msra.mxu0 0.0
        %501 = vmatprep.subr.mxu0 0.0
        %502 = vmatpush1.msra.mxu0 0.0
        %503 = vmatprep.subr.mxu0 0.0
        %504 = vmatpush1.msra.mxu0 0.0
        %505 = vmatprep.subr.mxu0 0.0
        %506 = vmatpush1.msra.mxu0 0.0
        %507 = vmatprep.mubr.f32.mxu0 0.0
        %v508 = vand.u32 %v205, 4294901760
        %v509 = vsub.f32 %v205, %v508
        %v510 = vand.u32 %v509, 4294901760
        %511 = vmatmul.mubr.f32.gmra.mrb[0].mxu0 %v510
        %v512 = vpop.f32.mrb[0].mxu0
        %v513 = vadd.f32 %v438, %v512
        %v514 = vpop.f32.mrb[0].mxu0
        %515 = vdwg.mxu0
        %516 = vmatprep.subr.mxu0 0.0
        %v517 = vand.u32 %v192, 4294901760
        %v518 = vsub.f32 %v192, %v517
        %v519 = vand.u32 %v518, 4294901760
        %520 = vmatpush1.msra.mxu0 %v519
        %521 = vmatprep.subr.mxu0 0.0
        %v522 = vand.u32 %v193, 4294901760
        %v523 = vsub.f32 %v193, %v522
        %v524 = vand.u32 %v523, 4294901760
        %525 = vmatpush1.msra.mxu0 %v524
        %526 = vmatprep.subr.mxu0 0.0
        %527 = vmatpush1.msra.mxu0 0.0
        %528 = vmatprep.subr.mxu0 0.0
        %529 = vmatpush1.msra.mxu0 0.0
        %530 = vmatprep.subr.mxu0 0.0
        %531 = vmatpush1.msra.mxu0 0.0
        %532 = vmatprep.subr.mxu0 0.0
        %533 = vmatpush1.msra.mxu0 0.0
        %534 = vmatprep.subr.mxu0 0.0
        %535 = vmatpush1.msra.mxu0 0.0
        %536 = vmatprep.subr.mxu0 0.0
        %537 = vmatpush1.msra.mxu0 0.0
        %538 = vmatprep.subr.mxu0 0.0
        %539 = vmatpush1.msra.mxu0 0.0
        %540 = vmatprep.subr.mxu0 0.0
        %541 = vmatpush1.msra.mxu0 0.0
        %542 = vmatprep.subr.mxu0 0.0
        %543 = vmatpush1.msra.mxu0 0.0
        %544 = vmatprep.subr.mxu0 0.0
        %545 = vmatpush1.msra.mxu0 0.0
        %546 = vmatprep.subr.mxu0 0.0
        %547 = vmatpush1.msra.mxu0 0.0
        %548 = vmatprep.subr.mxu0 0.0
        %549 = vmatpush1.msra.mxu0 0.0
        %550 = vmatprep.subr.mxu0 0.0
        %551 = vmatpush1.msra.mxu0 0.0
        %552 = vmatprep.subr.mxu0 0.0
        %553 = vmatpush1.msra.mxu0 0.0
        %554 = vmatprep.subr.mxu0 0.0
        %555 = vmatpush1.msra.mxu0 0.0
        %556 = vmatprep.subr.mxu0 0.0
        %557 = vmatpush1.msra.mxu0 0.0
        %558 = vmatprep.subr.mxu0 0.0
        %559 = vmatpush1.msra.mxu0 0.0
        %560 = vmatprep.subr.mxu0 0.0
        %561 = vmatpush1.msra.mxu0 0.0
        %562 = vmatprep.subr.mxu0 0.0
        %563 = vmatpush1.msra.mxu0 0.0
        %564 = vmatprep.subr.mxu0 0.0
        %565 = vmatpush1.msra.mxu0 0.0
        %566 = vmatprep.subr.mxu0 0.0
        %567 = vmatpush1.msra.mxu0 0.0
        %568 = vmatprep.subr.mxu0 0.0
        %569 = vmatpush1.msra.mxu0 0.0
        %570 = vmatprep.subr.mxu0 0.0
        %571 = vmatpush1.msra.mxu0 0.0
        %572 = vmatprep.subr.mxu0 0.0
        %573 = vmatpush1.msra.mxu0 0.0
        %574 = vmatprep.subr.mxu0 0.0
        %575 = vmatpush1.msra.mxu0 0.0
        %576 = vmatprep.subr.mxu0 0.0
        %577 = vmatpush1.msra.mxu0 0.0
        %578 = vmatprep.subr.mxu0 0.0
        %579 = vmatpush1.msra.mxu0 0.0
        %580 = vmatprep.subr.mxu0 0.0
        %581 = vmatpush1.msra.mxu0 0.0
        %582 = vmatprep.subr.mxu0 0.0
        %583 = vmatpush1.msra.mxu0 0.0
        %584 = vmatprep.subr.mxu0 0.0
        %585 = vmatpush1.msra.mxu0 0.0
        %586 = vmatprep.mubr.f32.mxu0 0.0
        %v587 = vand.u32 %v205, 4294901760
        %588 = vmatmul.mubr.f32.gmra.mrb[0].mxu0 %v587
        %v589 = vpop.f32.mrb[0].mxu0
        %v590 = vadd.f32 %v513, %v589
        %v591 = vpop.f32.mrb[0].mxu0
        %592 = vdwg.mxu0
        %593 = vmatprep.subr.mxu0 0.0
        %v594 = vand.u32 %v192, 4294901760
        %595 = vmatpush1.msra.mxu0 %v594
        %596 = vmatprep.subr.mxu0 0.0
        %v597 = vand.u32 %v193, 4294901760
        %598 = vmatpush1.msra.mxu0 %v597
        %599 = vmatprep.subr.mxu0 0.0
        %600 = vmatpush1.msra.mxu0 0.0
        %601 = vmatprep.subr.mxu0 0.0
        %602 = vmatpush1.msra.mxu0 0.0
        %603 = vmatprep.subr.mxu0 0.0
        %604 = vmatpush1.msra.mxu0 0.0
        %605 = vmatprep.subr.mxu0 0.0
        %606 = vmatpush1.msra.mxu0 0.0
        %607 = vmatprep.subr.mxu0 0.0
        %608 = vmatpush1.msra.mxu0 0.0
        %609 = vmatprep.subr.mxu0 0.0
        %610 = vmatpush1.msra.mxu0 0.0
        %611 = vmatprep.subr.mxu0 0.0
        %612 = vmatpush1.msra.mxu0 0.0
        %613 = vmatprep.subr.mxu0 0.0
        %614 = vmatpush1.msra.mxu0 0.0
        %615 = vmatprep.subr.mxu0 0.0
        %616 = vmatpush1.msra.mxu0 0.0
        %617 = vmatprep.subr.mxu0 0.0
        %618 = vmatpush1.msra.mxu0 0.0
        %619 = vmatprep.subr.mxu0 0.0
        %620 = vmatpush1.msra.mxu0 0.0
        %621 = vmatprep.subr.mxu0 0.0
        %622 = vmatpush1.msra.mxu0 0.0
        %623 = vmatprep.subr.mxu0 0.0
        %624 = vmatpush1.msra.mxu0 0.0
        %625 = vmatprep.subr.mxu0 0.0
        %626 = vmatpush1.msra.mxu0 0.0
        %627 = vmatprep.subr.mxu0 0.0
        %628 = vmatpush1.msra.mxu0 0.0
        %629 = vmatprep.subr.mxu0 0.0
        %630 = vmatpush1.msra.mxu0 0.0
        %631 = vmatprep.subr.mxu0 0.0
        %632 = vmatpush1.msra.mxu0 0.0
        %633 = vmatprep.subr.mxu0 0.0
        %634 = vmatpush1.msra.mxu0 0.0
        %635 = vmatprep.subr.mxu0 0.0
        %636 = vmatpush1.msra.mxu0 0.0
        %637 = vmatprep.subr.mxu0 0.0
        %638 = vmatpush1.msra.mxu0 0.0
        %639 = vmatprep.subr.mxu0 0.0
        %640 = vmatpush1.msra.mxu0 0.0
        %641 = vmatprep.subr.mxu0 0.0
        %642 = vmatpush1.msra.mxu0 0.0
        %643 = vmatprep.subr.mxu0 0.0
        %644 = vmatpush1.msra.mxu0 0.0
        %645 = vmatprep.subr.mxu0 0.0
        %646 = vmatpush1.msra.mxu0 0.0
        %647 = vmatprep.subr.mxu0 0.0
        %648 = vmatpush1.msra.mxu0 0.0
        %649 = vmatprep.subr.mxu0 0.0
        %650 = vmatpush1.msra.mxu0 0.0
        %651 = vmatprep.subr.mxu0 0.0
        %652 = vmatpush1.msra.mxu0 0.0
        %653 = vmatprep.subr.mxu0 0.0
        %654 = vmatpush1.msra.mxu0 0.0
        %655 = vmatprep.subr.mxu0 0.0
        %656 = vmatpush1.msra.mxu0 0.0
        %657 = vmatprep.subr.mxu0 0.0
        %658 = vmatpush1.msra.mxu0 0.0
        %659 = vmatprep.mubr.f32.mxu0 0.0
        %v660 = vand.u32 %v205, 4294901760
        %661 = vmatmul.mubr.f32.gmra.mrb[0].mxu0 %v660
        %v662 = vpop.f32.mrb[0].mxu0
        %v663 = vadd.f32 %v590, %v662
        %v664 = vpop.f32.mrb[0].mxu0
        %665 = vdwg.mxu0
        %666 = vst [vmem:[%s183] sm:$0xff] %v663
        %667 = vset.pattern.permute.xlu0 1
        %668 = vperm.xlu0 %667, %v191
        %v669 = vpop.permute.xlu0 %668
        %vm670 = vcmp.eq.s32.totalorder %v196, %v669
        %v671 = vsel %vm670, 1, 0
        %v672 = vcvt.s32.f32 %v671
        %vm673 = vcmask 64512
        %v675 = vsel %vm673, %v672, 0
        %677 = vmatprep.subr.mxu0 0.0
        %v678 = vand.u32 %v194, 4294901760
        %679 = vmatpush1.msra.mxu0 %v678
        %680 = vmatprep.subr.mxu0 0.0
        %681 = vmatpush1.msra.mxu0 0.0
        %682 = vmatprep.subr.mxu0 0.0
        %683 = vmatpush1.msra.mxu0 0.0
        %684 = vmatprep.subr.mxu0 0.0
        %685 = vmatpush1.msra.mxu0 0.0
        %686 = vmatprep.subr.mxu0 0.0
        %687 = vmatpush1.msra.mxu0 0.0
        %688 = vmatprep.subr.mxu0 0.0
        %689 = vmatpush1.msra.mxu0 0.0
        %690 = vmatprep.subr.mxu0 0.0
        %691 = vmatpush1.msra.mxu0 0.0
        %692 = vmatprep.subr.mxu0 0.0
        %693 = vmatpush1.msra.mxu0 0.0
        %694 = vmatprep.subr.mxu0 0.0
        %695 = vmatpush1.msra.mxu0 0.0
        %696 = vmatprep.subr.mxu0 0.0
        %697 = vmatpush1.msra.mxu0 0.0
        %698 = vmatprep.subr.mxu0 0.0
        %699 = vmatpush1.msra.mxu0 0.0
        %700 = vmatprep.subr.mxu0 0.0
        %701 = vmatpush1.msra.mxu0 0.0
        %702 = vmatprep.subr.mxu0 0.0
        %703 = vmatpush1.msra.mxu0 0.0
        %704 = vmatprep.subr.mxu0 0.0
        %705 = vmatpush1.msra.mxu0 0.0
        %706 = vmatprep.subr.mxu0 0.0
        %707 = vmatpush1.msra.mxu0 0.0
        %708 = vmatprep.subr.mxu0 0.0
        %709 = vmatpush1.msra.mxu0 0.0
        %710 = vmatprep.subr.mxu0 0.0
        %711 = vmatpush1.msra.mxu0 0.0
        %712 = vmatprep.subr.mxu0 0.0
        %713 = vmatpush1.msra.mxu0 0.0
        %714 = vmatprep.subr.mxu0 0.0
        %715 = vmatpush1.msra.mxu0 0.0
        %716 = vmatprep.subr.mxu0 0.0
        %717 = vmatpush1.msra.mxu0 0.0
        %718 = vmatprep.subr.mxu0 0.0
        %719 = vmatpush1.msra.mxu0 0.0
        %720 = vmatprep.subr.mxu0 0.0
        %721 = vmatpush1.msra.mxu0 0.0
        %722 = vmatprep.subr.mxu0 0.0
        %723 = vmatpush1.msra.mxu0 0.0
        %724 = vmatprep.subr.mxu0 0.0
        %725 = vmatpush1.msra.mxu0 0.0
        %726 = vmatprep.subr.mxu0 0.0
        %727 = vmatpush1.msra.mxu0 0.0
        %728 = vmatprep.subr.mxu0 0.0
        %729 = vmatpush1.msra.mxu0 0.0
        %730 = vmatprep.subr.mxu0 0.0
        %731 = vmatpush1.msra.mxu0 0.0
        %732 = vmatprep.subr.mxu0 0.0
        %733 = vmatpush1.msra.mxu0 0.0
        %734 = vmatprep.subr.mxu0 0.0
        %735 = vmatpush1.msra.mxu0 0.0
        %736 = vmatprep.subr.mxu0 0.0
        %737 = vmatpush1.msra.mxu0 0.0
        %738 = vmatprep.subr.mxu0 0.0
        %739 = vmatpush1.msra.mxu0 0.0
        %740 = vmatprep.subr.mxu0 0.0
        %741 = vmatpush1.msra.mxu0 0.0
        %742 = vmatprep.mubr.f32.mxu0 0.0
        %v743 = vand.u32 %v675, 4294901760
        %v744 = vsub.f32 %v675, %v743
        %v745 = vand.u32 %v744, 4294901760
        %v746 = vsub.f32 %v744, %v745
        %v747 = vand.u32 %v746, 4294901760
        %748 = vmatmul.mubr.f32.gmra.mrb[0].mxu0 %v747
        %v749 = vpop.f32.mrb[0].mxu0
        %v750 = vadd.f32 0.0, %v749
        %v751 = vpop.f32.mrb[0].mxu0
        %752 = vdwg.mxu0
        %753 = vmatprep.subr.mxu0 0.0
        %v754 = vand.u32 %v194, 4294901760
        %v755 = vsub.f32 %v194, %v754
        %v756 = vand.u32 %v755, 4294901760
        %v757 = vsub.f32 %v755, %v756
        %v758 = vand.u32 %v757, 4294901760
        %759 = vmatpush1.msra.mxu0 %v758
        %760 = vmatprep.subr.mxu0 0.0
        %761 = vmatpush1.msra.mxu0 0.0
        %762 = vmatprep.subr.mxu0 0.0
        %763 = vmatpush1.msra.mxu0 0.0
        %764 = vmatprep.subr.mxu0 0.0
        %765 = vmatpush1.msra.mxu0 0.0
        %766 = vmatprep.subr.mxu0 0.0
        %767 = vmatpush1.msra.mxu0 0.0
        %768 = vmatprep.subr.mxu0 0.0
        %769 = vmatpush1.msra.mxu0 0.0
        %770 = vmatprep.subr.mxu0 0.0
        %771 = vmatpush1.msra.mxu0 0.0
        %772 = vmatprep.subr.mxu0 0.0
        %773 = vmatpush1.msra.mxu0 0.0
        %774 = vmatprep.subr.mxu0 0.0
        %775 = vmatpush1.msra.mxu0 0.0
        %776 = vmatprep.subr.mxu0 0.0
        %777 = vmatpush1.msra.mxu0 0.0
        %778 = vmatprep.subr.mxu0 0.0
        %779 = vmatpush1.msra.mxu0 0.0
        %780 = vmatprep.subr.mxu0 0.0
        %781 = vmatpush1.msra.mxu0 0.0
        %782 = vmatprep.subr.mxu0 0.0
        %783 = vmatpush1.msra.mxu0 0.0
        %784 = vmatprep.subr.mxu0 0.0
        %785 = vmatpush1.msra.mxu0 0.0
        %786 = vmatprep.subr.mxu0 0.0
        %787 = vmatpush1.msra.mxu0 0.0
        %788 = vmatprep.subr.mxu0 0.0
        %789 = vmatpush1.msra.mxu0 0.0
        %790 = vmatprep.subr.mxu0 0.0
        %791 = vmatpush1.msra.mxu0 0.0
        %792 = vmatprep.subr.mxu0 0.0
        %793 = vmatpush1.msra.mxu0 0.0
        %794 = vmatprep.subr.mxu0 0.0
        %795 = vmatpush1.msra.mxu0 0.0
        %796 = vmatprep.subr.mxu0 0.0
        %797 = vmatpush1.msra.mxu0 0.0
        %798 = vmatprep.subr.mxu0 0.0
        %799 = vmatpush1.msra.mxu0 0.0
        %800 = vmatprep.subr.mxu0 0.0
        %801 = vmatpush1.msra.mxu0 0.0
        %802 = vmatprep.subr.mxu0 0.0
        %803 = vmatpush1.msra.mxu0 0.0
        %804 = vmatprep.subr.mxu0 0.0
        %805 = vmatpush1.msra.mxu0 0.0
        %806 = vmatprep.subr.mxu0 0.0
        %807 = vmatpush1.msra.mxu0 0.0
        %808 = vmatprep.subr.mxu0 0.0
        %809 = vmatpush1.msra.mxu0 0.0
        %810 = vmatprep.subr.mxu0 0.0
        %811 = vmatpush1.msra.mxu0 0.0
        %812 = vmatprep.subr.mxu0 0.0
        %813 = vmatpush1.msra.mxu0 0.0
        %814 = vmatprep.subr.mxu0 0.0
        %815 = vmatpush1.msra.mxu0 0.0
        %816 = vmatprep.subr.mxu0 0.0
        %817 = vmatpush1.msra.mxu0 0.0
        %818 = vmatprep.subr.mxu0 0.0
        %819 = vmatpush1.msra.mxu0 0.0
        %820 = vmatprep.subr.mxu0 0.0
        %821 = vmatpush1.msra.mxu0 0.0
        %822 = vmatprep.mubr.f32.mxu0 0.0
        %v823 = vand.u32 %v675, 4294901760
        %824 = vmatmul.mubr.f32.gmra.mrb[0].mxu0 %v823
        %v825 = vpop.f32.mrb[0].mxu0
        %v826 = vadd.f32 %v750, %v825
        %v827 = vpop.f32.mrb[0].mxu0
        %828 = vdwg.mxu0
        %829 = vmatprep.subr.mxu0 0.0
        %v830 = vand.u32 %v194, 4294901760
        %v831 = vsub.f32 %v194, %v830
        %832 = vmatpush1.msra.mxu0 %v831
        %833 = vmatprep.subr.mxu0 0.0
        %834 = vmatpush1.msra.mxu0 0.0
        %835 = vmatprep.subr.mxu0 0.0
        %836 = vmatpush1.msra.mxu0 0.0
        %837 = vmatprep.subr.mxu0 0.0
        %838 = vmatpush1.msra.mxu0 0.0
        %839 = vmatprep.subr.mxu0 0.0
        %840 = vmatpush1.msra.mxu0 0.0
        %841 = vmatprep.subr.mxu0 0.0
        %842 = vmatpush1.msra.mxu0 0.0
        %843 = vmatprep.subr.mxu0 0.0
        %844 = vmatpush1.msra.mxu0 0.0
        %845 = vmatprep.subr.mxu0 0.0
        %846 = vmatpush1.msra.mxu0 0.0
        %847 = vmatprep.subr.mxu0 0.0
        %848 = vmatpush1.msra.mxu0 0.0
        %849 = vmatprep.subr.mxu0 0.0
        %850 = vmatpush1.msra.mxu0 0.0
        %851 = vmatprep.subr.mxu0 0.0
        %852 = vmatpush1.msra.mxu0 0.0
        %853 = vmatprep.subr.mxu0 0.0
        %854 = vmatpush1.msra.mxu0 0.0
        %855 = vmatprep.subr.mxu0 0.0
        %856 = vmatpush1.msra.mxu0 0.0
        %857 = vmatprep.subr.mxu0 0.0
        %858 = vmatpush1.msra.mxu0 0.0
        %859 = vmatprep.subr.mxu0 0.0
        %860 = vmatpush1.msra.mxu0 0.0
        %861 = vmatprep.subr.mxu0 0.0
        %862 = vmatpush1.msra.mxu0 0.0
        %863 = vmatprep.subr.mxu0 0.0
        %864 = vmatpush1.msra.mxu0 0.0
        %865 = vmatprep.subr.mxu0 0.0
        %866 = vmatpush1.msra.mxu0 0.0
        %867 = vmatprep.subr.mxu0 0.0
        %868 = vmatpush1.msra.mxu0 0.0
        %869 = vmatprep.subr.mxu0 0.0
        %870 = vmatpush1.msra.mxu0 0.0
        %871 = vmatprep.subr.mxu0 0.0
        %872 = vmatpush1.msra.mxu0 0.0
        %873 = vmatprep.subr.mxu0 0.0
        %874 = vmatpush1.msra.mxu0 0.0
        %875 = vmatprep.subr.mxu0 0.0
        %876 = vmatpush1.msra.mxu0 0.0
        %877 = vmatprep.subr.mxu0 0.0
        %878 = vmatpush1.msra.mxu0 0.0
        %879 = vmatprep.subr.mxu0 0.0
        %880 = vmatpush1.msra.mxu0 0.0
        %881 = vmatprep.subr.mxu0 0.0
        %882 = vmatpush1.msra.mxu0 0.0
        %883 = vmatprep.subr.mxu0 0.0
        %884 = vmatpush1.msra.mxu0 0.0
        %885 = vmatprep.subr.mxu0 0.0
        %886 = vmatpush1.msra.mxu0 0.0
        %887 = vmatprep.subr.mxu0 0.0
        %888 = vmatpush1.msra.mxu0 0.0
        %889 = vmatprep.subr.mxu0 0.0
        %890 = vmatpush1.msra.mxu0 0.0
        %891 = vmatprep.subr.mxu0 0.0
        %892 = vmatpush1.msra.mxu0 0.0
        %893 = vmatprep.subr.mxu0 0.0
        %894 = vmatpush1.msra.mxu0 0.0
        %895 = vmatprep.mubr.f32.mxu0 0.0
        %v896 = vand.u32 %v675, 4294901760
        %v897 = vsub.f32 %v675, %v896
        %898 = vmatmul.mubr.f32.gmra.mrb[0].mxu0 %v897
        %v899 = vpop.f32.mrb[0].mxu0
        %v900 = vadd.f32 %v826, %v899
        %v901 = vpop.f32.mrb[0].mxu0
        %902 = vdwg.mxu0
        %903 = vmatprep.subr.mxu0 0.0
        %v904 = vand.u32 %v194, 4294901760
        %905 = vmatpush1.msra.mxu0 %v904
        %906 = vmatprep.subr.mxu0 0.0
        %907 = vmatpush1.msra.mxu0 0.0
        %908 = vmatprep.subr.mxu0 0.0
        %909 = vmatpush1.msra.mxu0 0.0
        %910 = vmatprep.subr.mxu0 0.0
        %911 = vmatpush1.msra.mxu0 0.0
        %912 = vmatprep.subr.mxu0 0.0
        %913 = vmatpush1.msra.mxu0 0.0
        %914 = vmatprep.subr.mxu0 0.0
        %915 = vmatpush1.msra.mxu0 0.0
        %916 = vmatprep.subr.mxu0 0.0
        %917 = vmatpush1.msra.mxu0 0.0
        %918 = vmatprep.subr.mxu0 0.0
        %919 = vmatpush1.msra.mxu0 0.0
        %920 = vmatprep.subr.mxu0 0.0
        %921 = vmatpush1.msra.mxu0 0.0
        %922 = vmatprep.subr.mxu0 0.0
        %923 = vmatpush1.msra.mxu0 0.0
        %924 = vmatprep.subr.mxu0 0.0
        %925 = vmatpush1.msra.mxu0 0.0
        %926 = vmatprep.subr.mxu0 0.0
        %927 = vmatpush1.msra.mxu0 0.0
        %928 = vmatprep.subr.mxu0 0.0
        %929 = vmatpush1.msra.mxu0 0.0
        %930 = vmatprep.subr.mxu0 0.0
        %931 = vmatpush1.msra.mxu0 0.0
        %932 = vmatprep.subr.mxu0 0.0
        %933 = vmatpush1.msra.mxu0 0.0
        %934 = vmatprep.subr.mxu0 0.0
        %935 = vmatpush1.msra.mxu0 0.0
        %936 = vmatprep.subr.mxu0 0.0
        %937 = vmatpush1.msra.mxu0 0.0
        %938 = vmatprep.subr.mxu0 0.0
        %939 = vmatpush1.msra.mxu0 0.0
        %940 = vmatprep.subr.mxu0 0.0
        %941 = vmatpush1.msra.mxu0 0.0
        %942 = vmatprep.subr.mxu0 0.0
        %943 = vmatpush1.msra.mxu0 0.0
        %944 = vmatprep.subr.mxu0 0.0
        %945 = vmatpush1.msra.mxu0 0.0
        %946 = vmatprep.subr.mxu0 0.0
        %947 = vmatpush1.msra.mxu0 0.0
        %948 = vmatprep.subr.mxu0 0.0
        %949 = vmatpush1.msra.mxu0 0.0
        %950 = vmatprep.subr.mxu0 0.0
        %951 = vmatpush1.msra.mxu0 0.0
        %952 = vmatprep.subr.mxu0 0.0
        %953 = vmatpush1.msra.mxu0 0.0
        %954 = vmatprep.subr.mxu0 0.0
        %955 = vmatpush1.msra.mxu0 0.0
        %956 = vmatprep.subr.mxu0 0.0
        %957 = vmatpush1.msra.mxu0 0.0
        %958 = vmatprep.subr.mxu0 0.0
        %959 = vmatpush1.msra.mxu0 0.0
        %960 = vmatprep.subr.mxu0 0.0
        %961 = vmatpush1.msra.mxu0 0.0
        %962 = vmatprep.subr.mxu0 0.0
        %963 = vmatpush1.msra.mxu0 0.0
        %964 = vmatprep.subr.mxu0 0.0
        %965 = vmatpush1.msra.mxu0 0.0
        %966 = vmatprep.subr.mxu0 0.0
        %967 = vmatpush1.msra.mxu0 0.0
        %968 = vmatprep.mubr.f32.mxu0 0.0
        %v969 = vand.u32 %v675, 4294901760
        %v970 = vsub.f32 %v675, %v969
        %v971 = vand.u32 %v970, 4294901760
        %972 = vmatmul.mubr.f32.gmra.mrb[0].mxu0 %v971
        %v973 = vpop.f32.mrb[0].mxu0
        %v974 = vadd.f32 %v900, %v973
        %v975 = vpop.f32.mrb[0].mxu0
        %976 = vdwg.mxu0
        %977 = vmatprep.subr.mxu0 0.0
        %v978 = vand.u32 %v194, 4294901760
        %v979 = vsub.f32 %v194, %v978
        %v980 = vand.u32 %v979, 4294901760
        %981 = vmatpush1.msra.mxu0 %v980
        %982 = vmatprep.subr.mxu0 0.0
        %983 = vmatpush1.msra.mxu0 0.0
        %984 = vmatprep.subr.mxu0 0.0
        %985 = vmatpush1.msra.mxu0 0.0
        %986 = vmatprep.subr.mxu0 0.0
        %987 = vmatpush1.msra.mxu0 0.0
        %988 = vmatprep.subr.mxu0 0.0
        %989 = vmatpush1.msra.mxu0 0.0
        %990 = vmatprep.subr.mxu0 0.0
        %991 = vmatpush1.msra.mxu0 0.0
        %992 = vmatprep.subr.mxu0 0.0
        %993 = vmatpush1.msra.mxu0 0.0
        %994 = vmatprep.subr.mxu0 0.0
        %995 = vmatpush1.msra.mxu0 0.0
        %996 = vmatprep.subr.mxu0 0.0
        %997 = vmatpush1.msra.mxu0 0.0
        %998 = vmatprep.subr.mxu0 0.0
        %999 = vmatpush1.msra.mxu0 0.0
        %1000 = vmatprep.subr.mxu0 0.0
        %1001 = vmatpush1.msra.mxu0 0.0
        %1002 = vmatprep.subr.mxu0 0.0
        %1003 = vmatpush1.msra.mxu0 0.0
        %1004 = vmatprep.subr.mxu0 0.0
        %1005 = vmatpush1.msra.mxu0 0.0
        %1006 = vmatprep.subr.mxu0 0.0
        %1007 = vmatpush1.msra.mxu0 0.0
        %1008 = vmatprep.subr.mxu0 0.0
        %1009 = vmatpush1.msra.mxu0 0.0
        %1010 = vmatprep.subr.mxu0 0.0
        %1011 = vmatpush1.msra.mxu0 0.0
        %1012 = vmatprep.subr.mxu0 0.0
        %1013 = vmatpush1.msra.mxu0 0.0
        %1014 = vmatprep.subr.mxu0 0.0
        %1015 = vmatpush1.msra.mxu0 0.0
        %1016 = vmatprep.subr.mxu0 0.0
        %1017 = vmatpush1.msra.mxu0 0.0
        %1018 = vmatprep.subr.mxu0 0.0
        %1019 = vmatpush1.msra.mxu0 0.0
        %1020 = vmatprep.subr.mxu0 0.0
        %1021 = vmatpush1.msra.mxu0 0.0
        %1022 = vmatprep.subr.mxu0 0.0
        %1023 = vmatpush1.msra.mxu0 0.0
        %1024 = vmatprep.subr.mxu0 0.0
        %1025 = vmatpush1.msra.mxu0 0.0
        %1026 = vmatprep.subr.mxu0 0.0
        %1027 = vmatpush1.msra.mxu0 0.0
        %1028 = vmatprep.subr.mxu0 0.0
        %1029 = vmatpush1.msra.mxu0 0.0
        %1030 = vmatprep.subr.mxu0 0.0
        %1031 = vmatpush1.msra.mxu0 0.0
        %1032 = vmatprep.subr.mxu0 0.0
        %1033 = vmatpush1.msra.mxu0 0.0
        %1034 = vmatprep.subr.mxu0 0.0
        %1035 = vmatpush1.msra.mxu0 0.0
        %1036 = vmatprep.subr.mxu0 0.0
        %1037 = vmatpush1.msra.mxu0 0.0
        %1038 = vmatprep.subr.mxu0 0.0
        %1039 = vmatpush1.msra.mxu0 0.0
        %1040 = vmatprep.subr.mxu0 0.0
        %1041 = vmatpush1.msra.mxu0 0.0
        %1042 = vmatprep.subr.mxu0 0.0
        %1043 = vmatpush1.msra.mxu0 0.0
        %1044 = vmatprep.mubr.f32.mxu0 0.0
        %v1045 = vand.u32 %v675, 4294901760
        %1046 = vmatmul.mubr.f32.gmra.mrb[0].mxu0 %v1045
        %v1047 = vpop.f32.mrb[0].mxu0
        %v1048 = vadd.f32 %v974, %v1047
        %v1049 = vpop.f32.mrb[0].mxu0
        %1050 = vdwg.mxu0
        %1051 = vmatprep.subr.mxu0 0.0
        %v1052 = vand.u32 %v194, 4294901760
        %1053 = vmatpush1.msra.mxu0 %v1052
        %1054 = vmatprep.subr.mxu0 0.0
        %1055 = vmatpush1.msra.mxu0 0.0
        %1056 = vmatprep.subr.mxu0 0.0
        %1057 = vmatpush1.msra.mxu0 0.0
        %1058 = vmatprep.subr.mxu0 0.0
        %1059 = vmatpush1.msra.mxu0 0.0
        %1060 = vmatprep.subr.mxu0 0.0
        %1061 = vmatpush1.msra.mxu0 0.0
        %1062 = vmatprep.subr.mxu0 0.0
        %1063 = vmatpush1.msra.mxu0 0.0
        %1064 = vmatprep.subr.mxu0 0.0
        %1065 = vmatpush1.msra.mxu0 0.0
        %1066 = vmatprep.subr.mxu0 0.0
        %1067 = vmatpush1.msra.mxu0 0.0
        %1068 = vmatprep.subr.mxu0 0.0
        %1069 = vmatpush1.msra.mxu0 0.0
        %1070 = vmatprep.subr.mxu0 0.0
        %1071 = vmatpush1.msra.mxu0 0.0
        %1072 = vmatprep.subr.mxu0 0.0
        %1073 = vmatpush1.msra.mxu0 0.0
        %1074 = vmatprep.subr.mxu0 0.0
        %1075 = vmatpush1.msra.mxu0 0.0
        %1076 = vmatprep.subr.mxu0 0.0
        %1077 = vmatpush1.msra.mxu0 0.0
        %1078 = vmatprep.subr.mxu0 0.0
        %1079 = vmatpush1.msra.mxu0 0.0
        %1080 = vmatprep.subr.mxu0 0.0
        %1081 = vmatpush1.msra.mxu0 0.0
        %1082 = vmatprep.subr.mxu0 0.0
        %1083 = vmatpush1.msra.mxu0 0.0
        %1084 = vmatprep.subr.mxu0 0.0
        %1085 = vmatpush1.msra.mxu0 0.0
        %1086 = vmatprep.subr.mxu0 0.0
        %1087 = vmatpush1.msra.mxu0 0.0
        %1088 = vmatprep.subr.mxu0 0.0
        %1089 = vmatpush1.msra.mxu0 0.0
        %1090 = vmatprep.subr.mxu0 0.0
        %1091 = vmatpush1.msra.mxu0 0.0
        %1092 = vmatprep.subr.mxu0 0.0
        %1093 = vmatpush1.msra.mxu0 0.0
        %1094 = vmatprep.subr.mxu0 0.0
        %1095 = vmatpush1.msra.mxu0 0.0
        %1096 = vmatprep.subr.mxu0 0.0
        %1097 = vmatpush1.msra.mxu0 0.0
        %1098 = vmatprep.subr.mxu0 0.0
        %1099 = vmatpush1.msra.mxu0 0.0
        %1100 = vmatprep.subr.mxu0 0.0
        %1101 = vmatpush1.msra.mxu0 0.0
        %1102 = vmatprep.subr.mxu0 0.0
        %1103 = vmatpush1.msra.mxu0 0.0
        %1104 = vmatprep.subr.mxu0 0.0
        %1105 = vmatpush1.msra.mxu0 0.0
        %1106 = vmatprep.subr.mxu0 0.0
        %1107 = vmatpush1.msra.mxu0 0.0
        %1108 = vmatprep.subr.mxu0 0.0
        %1109 = vmatpush1.msra.mxu0 0.0
        %1110 = vmatprep.subr.mxu0 0.0
        %1111 = vmatpush1.msra.mxu0 0.0
        %1112 = vmatprep.subr.mxu0 0.0
        %1113 = vmatpush1.msra.mxu0 0.0
        %1114 = vmatprep.subr.mxu0 0.0
        %1115 = vmatpush1.msra.mxu0 0.0
        %1116 = vmatprep.mubr.f32.mxu0 0.0
        %v1117 = vand.u32 %v675, 4294901760
        %1118 = vmatmul.mubr.f32.gmra.mrb[0].mxu0 %v1117
        %v1119 = vpop.f32.mrb[0].mxu0
        %v1120 = vadd.f32 %v1048, %v1119
        %v1121 = vpop.f32.mrb[0].mxu0
        %1122 = vdwg.mxu0
        %1123 = vst [vmem:[%s183 + $0x8] sm:$0xff] %v1120
        %1124 = vset.pattern.permute.xlu0 2
        %1125 = vperm.xlu0 %1124, %v191
        %v1126 = vpop.permute.xlu0 %1125
        %vm1127 = vcmp.eq.s32.totalorder %v196, %v1126
        %v1128 = vsel %vm1127, 1, 0
        %v1129 = vcvt.s32.f32 %v1128
        %v1131 = vsel %vm203, %v1129, 0
        %1133 = vmatprep.subr.mxu0 0.0
        %v1134 = vand.u32 %v192, 4294901760
        %1135 = vmatpush1.msra.mxu0 %v1134
        %1136 = vmatprep.subr.mxu0 0.0
        %v1137 = vand.u32 %v193, 4294901760
        %1138 = vmatpush1.msra.mxu0 %v1137
        %1139 = vmatprep.subr.mxu0 0.0
        %1140 = vmatpush1.msra.mxu0 0.0
        %1141 = vmatprep.subr.mxu0 0.0
        %1142 = vmatpush1.msra.mxu0 0.0
        %1143 = vmatprep.subr.mxu0 0.0
        %1144 = vmatpush1.msra.mxu0 0.0
        %1145 = vmatprep.subr.mxu0 0.0
        %1146 = vmatpush1.msra.mxu0 0.0
        %1147 = vmatprep.subr.mxu0 0.0
        %1148 = vmatpush1.msra.mxu0 0.0
        %1149 = vmatprep.subr.mxu0 0.0
        %1150 = vmatpush1.msra.mxu0 0.0
        %1151 = vmatprep.subr.mxu0 0.0
        %1152 = vmatpush1.msra.mxu0 0.0
        %1153 = vmatprep.subr.mxu0 0.0
        %1154 = vmatpush1.msra.mxu0 0.0
        %1155 = vmatprep.subr.mxu0 0.0
        %1156 = vmatpush1.msra.mxu0 0.0
        %1157 = vmatprep.subr.mxu0 0.0
        %1158 = vmatpush1.msra.mxu0 0.0
        %1159 = vmatprep.subr.mxu0 0.0
        %1160 = vmatpush1.msra.mxu0 0.0
        %1161 = vmatprep.subr.mxu0 0.0
        %1162 = vmatpush1.msra.mxu0 0.0
        %1163 = vmatprep.subr.mxu0 0.0
        %1164 = vmatpush1.msra.mxu0 0.0
        %1165 = vmatprep.subr.mxu0 0.0
        %1166 = vmatpush1.msra.mxu0 0.0
        %1167 = vmatprep.subr.mxu0 0.0
        %1168 = vmatpush1.msra.mxu0 0.0
        %1169 = vmatprep.subr.mxu0 0.0
        %1170 = vmatpush1.msra.mxu0 0.0
        %1171 = vmatprep.subr.mxu0 0.0
        %1172 = vmatpush1.msra.mxu0 0.0
        %1173 = vmatprep.subr.mxu0 0.0
        %1174 = vmatpush1.msra.mxu0 0.0
        %1175 = vmatprep.subr.mxu0 0.0
        %1176 = vmatpush1.msra.mxu0 0.0
        %1177 = vmatprep.subr.mxu0 0.0
        %1178 = vmatpush1.msra.mxu0 0.0
        %1179 = vmatprep.subr.mxu0 0.0
        %1180 = vmatpush1.msra.mxu0 0.0
        %1181 = vmatprep.subr.mxu0 0.0
        %1182 = vmatpush1.msra.mxu0 0.0
        %1183 = vmatprep.subr.mxu0 0.0
        %1184 = vmatpush1.msra.mxu0 0.0
        %1185 = vmatprep.subr.mxu0 0.0
        %1186 = vmatpush1.msra.mxu0 0.0
        %1187 = vmatprep.subr.mxu0 0.0
        %1188 = vmatpush1.msra.mxu0 0.0
        %1189 = vmatprep.subr.mxu0 0.0
        %1190 = vmatpush1.msra.mxu0 0.0
        %1191 = vmatprep.subr.mxu0 0.0
        %1192 = vmatpush1.msra.mxu0 0.0
        %1193 = vmatprep.subr.mxu0 0.0
        %1194 = vmatpush1.msra.mxu0 0.0
        %1195 = vmatprep.subr.mxu0 0.0
        %1196 = vmatpush1.msra.mxu0 0.0
        %1197 = vmatprep.subr.mxu0 0.0
        %1198 = vmatpush1.msra.mxu0 0.0
        %1199 = vmatprep.mubr.f32.mxu0 0.0
        %v1200 = vand.u32 %v1131, 4294901760
        %v1201 = vsub.f32 %v1131, %v1200
        %v1202 = vand.u32 %v1201, 4294901760
        %v1203 = vsub.f32 %v1201, %v1202
        %v1204 = vand.u32 %v1203, 4294901760
        %1205 = vmatmul.mubr.f32.gmra.mrb[0].mxu0 %v1204
        %v1206 = vpop.f32.mrb[0].mxu0
        %v1207 = vadd.f32 0.0, %v1206
        %v1208 = vpop.f32.mrb[0].mxu0
        %1209 = vdwg.mxu0
        %1210 = vmatprep.subr.mxu0 0.0
        %v1211 = vand.u32 %v192, 4294901760
        %v1212 = vsub.f32 %v192, %v1211
        %v1213 = vand.u32 %v1212, 4294901760
        %v1214 = vsub.f32 %v1212, %v1213
        %v1215 = vand.u32 %v1214, 4294901760
        %1216 = vmatpush1.msra.mxu0 %v1215
        %1217 = vmatprep.subr.mxu0 0.0
        %v1218 = vand.u32 %v193, 4294901760
        %v1219 = vsub.f32 %v193, %v1218
        %v1220 = vand.u32 %v1219, 4294901760
        %v1221 = vsub.f32 %v1219, %v1220
        %v1222 = vand.u32 %v1221, 4294901760
        %1223 = vmatpush1.msra.mxu0 %v1222
        %1224 = vmatprep.subr.mxu0 0.0
        %1225 = vmatpush1.msra.mxu0 0.0
        %1226 = vmatprep.subr.mxu0 0.0
        %1227 = vmatpush1.msra.mxu0 0.0
        %1228 = vmatprep.subr.mxu0 0.0
        %1229 = vmatpush1.msra.mxu0 0.0
        %1230 = vmatprep.subr.mxu0 0.0
        %1231 = vmatpush1.msra.mxu0 0.0
        %1232 = vmatprep.subr.mxu0 0.0
        %1233 = vmatpush1.msra.mxu0 0.0
        %1234 = vmatprep.subr.mxu0 0.0
        %1235 = vmatpush1.msra.mxu0 0.0
        %1236 = vmatprep.subr.mxu0 0.0
        %1237 = vmatpush1.msra.mxu0 0.0
        %1238 = vmatprep.subr.mxu0 0.0
        %1239 = vmatpush1.msra.mxu0 0.0
        %1240 = vmatprep.subr.mxu0 0.0
        %1241 = vmatpush1.msra.mxu0 0.0
        %1242 = vmatprep.subr.mxu0 0.0
        %1243 = vmatpush1.msra.mxu0 0.0
        %1244 = vmatprep.subr.mxu0 0.0
        %1245 = vmatpush1.msra.mxu0 0.0
        %1246 = vmatprep.subr.mxu0 0.0
        %1247 = vmatpush1.msra.mxu0 0.0
        %1248 = vmatprep.subr.mxu0 0.0
        %1249 = vmatpush1.msra.mxu0 0.0
        %1250 = vmatprep.subr.mxu0 0.0
        %1251 = vmatpush1.msra.mxu0 0.0
        %1252 = vmatprep.subr.mxu0 0.0
        %1253 = vmatpush1.msra.mxu0 0.0
        %1254 = vmatprep.subr.mxu0 0.0
        %1255 = vmatpush1.msra.mxu0 0.0
        %1256 = vmatprep.subr.mxu0 0.0
        %1257 = vmatpush1.msra.mxu0 0.0
        %1258 = vmatprep.subr.mxu0 0.0
        %1259 = vmatpush1.msra.mxu0 0.0
        %1260 = vmatprep.subr.mxu0 0.0
        %1261 = vmatpush1.msra.mxu0 0.0
        %1262 = vmatprep.subr.mxu0 0.0
        %1263 = vmatpush1.msra.mxu0 0.0
        %1264 = vmatprep.subr.mxu0 0.0
        %1265 = vmatpush1.msra.mxu0 0.0
        %1266 = vmatprep.subr.mxu0 0.0
        %1267 = vmatpush1.msra.mxu0 0.0
        %1268 = vmatprep.subr.mxu0 0.0
        %1269 = vmatpush1.msra.mxu0 0.0
        %1270 = vmatprep.subr.mxu0 0.0
        %1271 = vmatpush1.msra.mxu0 0.0
        %1272 = vmatprep.subr.mxu0 0.0
        %1273 = vmatpush1.msra.mxu0 0.0
        %1274 = vmatprep.subr.mxu0 0.0
        %1275 = vmatpush1.msra.mxu0 0.0
        %1276 = vmatprep.subr.mxu0 0.0
        %1277 = vmatpush1.msra.mxu0 0.0
        %1278 = vmatprep.subr.mxu0 0.0
        %1279 = vmatpush1.msra.mxu0 0.0
        %1280 = vmatprep.subr.mxu0 0.0
        %1281 = vmatpush1.msra.mxu0 0.0
        %1282 = vmatprep.subr.mxu0 0.0
        %1283 = vmatpush1.msra.mxu0 0.0
        %1284 = vmatprep.mubr.f32.mxu0 0.0
        %v1285 = vand.u32 %v1131, 4294901760
        %1286 = vmatmul.mubr.f32.gmra.mrb[0].mxu0 %v1285
        %v1287 = vpop.f32.mrb[0].mxu0
        %v1288 = vadd.f32 %v1207, %v1287
        %v1289 = vpop.f32.mrb[0].mxu0
        %1290 = vdwg.mxu0
        %1291 = vmatprep.subr.mxu0 0.0
        %v1292 = vand.u32 %v192, 4294901760
        %v1293 = vsub.f32 %v192, %v1292
        %1294 = vmatpush1.msra.mxu0 %v1293
        %1295 = vmatprep.subr.mxu0 0.0
        %v1296 = vand.u32 %v193, 4294901760
        %v1297 = vsub.f32 %v193, %v1296
        %1298 = vmatpush1.msra.mxu0 %v1297
        %1299 = vmatprep.subr.mxu0 0.0
        %1300 = vmatpush1.msra.mxu0 0.0
        %1301 = vmatprep.subr.mxu0 0.0
        %1302 = vmatpush1.msra.mxu0 0.0
        %1303 = vmatprep.subr.mxu0 0.0
        %1304 = vmatpush1.msra.mxu0 0.0
        %1305 = vmatprep.subr.mxu0 0.0
        %1306 = vmatpush1.msra.mxu0 0.0
        %1307 = vmatprep.subr.mxu0 0.0
        %1308 = vmatpush1.msra.mxu0 0.0
        %1309 = vmatprep.subr.mxu0 0.0
        %1310 = vmatpush1.msra.mxu0 0.0
        %1311 = vmatprep.subr.mxu0 0.0
        %1312 = vmatpush1.msra.mxu0 0.0
        %1313 = vmatprep.subr.mxu0 0.0
        %1314 = vmatpush1.msra.mxu0 0.0
        %1315 = vmatprep.subr.mxu0 0.0
        %1316 = vmatpush1.msra.mxu0 0.0
        %1317 = vmatprep.subr.mxu0 0.0
        %1318 = vmatpush1.msra.mxu0 0.0
        %1319 = vmatprep.subr.mxu0 0.0
        %1320 = vmatpush1.msra.mxu0 0.0
        %1321 = vmatprep.subr.mxu0 0.0
        %1322 = vmatpush1.msra.mxu0 0.0
        %1323 = vmatprep.subr.mxu0 0.0
        %1324 = vmatpush1.msra.mxu0 0.0
        %1325 = vmatprep.subr.mxu0 0.0
        %1326 = vmatpush1.msra.mxu0 0.0
        %1327 = vmatprep.subr.mxu0 0.0
        %1328 = vmatpush1.msra.mxu0 0.0
        %1329 = vmatprep.subr.mxu0 0.0
        %1330 = vmatpush1.msra.mxu0 0.0
        %1331 = vmatprep.subr.mxu0 0.0
        %1332 = vmatpush1.msra.mxu0 0.0
        %1333 = vmatprep.subr.mxu0 0.0
        %1334 = vmatpush1.msra.mxu0 0.0
        %1335 = vmatprep.subr.mxu0 0.0
        %1336 = vmatpush1.msra.mxu0 0.0
        %1337 = vmatprep.subr.mxu0 0.0
        %1338 = vmatpush1.msra.mxu0 0.0
        %1339 = vmatprep.subr.mxu0 0.0
        %1340 = vmatpush1.msra.mxu0 0.0
        %1341 = vmatprep.subr.mxu0 0.0
        %1342 = vmatpush1.msra.mxu0 0.0
        %1343 = vmatprep.subr.mxu0 0.0
        %1344 = vmatpush1.msra.mxu0 0.0
        %1345 = vmatprep.subr.mxu0 0.0
        %1346 = vmatpush1.msra.mxu0 0.0
        %1347 = vmatprep.subr.mxu0 0.0
        %1348 = vmatpush1.msra.mxu0 0.0
        %1349 = vmatprep.subr.mxu0 0.0
        %1350 = vmatpush1.msra.mxu0 0.0
        %1351 = vmatprep.subr.mxu0 0.0
        %1352 = vmatpush1.msra.mxu0 0.0
        %1353 = vmatprep.subr.mxu0 0.0
        %1354 = vmatpush1.msra.mxu0 0.0
        %1355 = vmatprep.subr.mxu0 0.0
        %1356 = vmatpush1.msra.mxu0 0.0
        %1357 = vmatprep.subr.mxu0 0.0
        %1358 = vmatpush1.msra.mxu0 0.0
        %1359 = vmatprep.mubr.f32.mxu0 0.0
        %v1360 = vand.u32 %v1131, 4294901760
        %v1361 = vsub.f32 %v1131, %v1360
        %1362 = vmatmul.mubr.f32.gmra.mrb[0].mxu0 %v1361
        %v1363 = vpop.f32.mrb[0].mxu0
        %v1364 = vadd.f32 %v1288, %v1363
        %v1365 = vpop.f32.mrb[0].mxu0
        %1366 = vdwg.mxu0
        %1367 = vmatprep.subr.mxu0 0.0
        %v1368 = vand.u32 %v192, 4294901760
        %1369 = vmatpush1.msra.mxu0 %v1368
        %1370 = vmatprep.subr.mxu0 0.0
        %v1371 = vand.u32 %v193, 4294901760
        %1372 = vmatpush1.msra.mxu0 %v1371
        %1373 = vmatprep.subr.mxu0 0.0
        %1374 = vmatpush1.msra.mxu0 0.0
        %1375 = vmatprep.subr.mxu0 0.0
        %1376 = vmatpush1.msra.mxu0 0.0
        %1377 = vmatprep.subr.mxu0 0.0
        %1378 = vmatpush1.msra.mxu0 0.0
        %1379 = vmatprep.subr.mxu0 0.0
        %1380 = vmatpush1.msra.mxu0 0.0
        %1381 = vmatprep.subr.mxu0 0.0
        %1382 = vmatpush1.msra.mxu0 0.0
        %1383 = vmatprep.subr.mxu0 0.0
        %1384 = vmatpush1.msra.mxu0 0.0
        %1385 = vmatprep.subr.mxu0 0.0
        %1386 = vmatpush1.msra.mxu0 0.0
        %1387 = vmatprep.subr.mxu0 0.0
        %1388 = vmatpush1.msra.mxu0 0.0
        %1389 = vmatprep.subr.mxu0 0.0
        %1390 = vmatpush1.msra.mxu0 0.0
        %1391 = vmatprep.subr.mxu0 0.0
        %1392 = vmatpush1.msra.mxu0 0.0
        %1393 = vmatprep.subr.mxu0 0.0
        %1394 = vmatpush1.msra.mxu0 0.0
        %1395 = vmatprep.subr.mxu0 0.0
        %1396 = vmatpush1.msra.mxu0 0.0
        %1397 = vmatprep.subr.mxu0 0.0
        %1398 = vmatpush1.msra.mxu0 0.0
        %1399 = vmatprep.subr.mxu0 0.0
        %1400 = vmatpush1.msra.mxu0 0.0
        %1401 = vmatprep.subr.mxu0 0.0
        %1402 = vmatpush1.msra.mxu0 0.0
        %1403 = vmatprep.subr.mxu0 0.0
        %1404 = vmatpush1.msra.mxu0 0.0
        %1405 = vmatprep.subr.mxu0 0.0
        %1406 = vmatpush1.msra.mxu0 0.0
        %1407 = vmatprep.subr.mxu0 0.0
        %1408 = vmatpush1.msra.mxu0 0.0
        %1409 = vmatprep.subr.mxu0 0.0
        %1410 = vmatpush1.msra.mxu0 0.0
        %1411 = vmatprep.subr.mxu0 0.0
        %1412 = vmatpush1.msra.mxu0 0.0
        %1413 = vmatprep.subr.mxu0 0.0
        %1414 = vmatpush1.msra.mxu0 0.0
        %1415 = vmatprep.subr.mxu0 0.0
        %1416 = vmatpush1.msra.mxu0 0.0
        %1417 = vmatprep.subr.mxu0 0.0
        %1418 = vmatpush1.msra.mxu0 0.0
        %1419 = vmatprep.subr.mxu0 0.0
        %1420 = vmatpush1.msra.mxu0 0.0
        %1421 = vmatprep.subr.mxu0 0.0
        %1422 = vmatpush1.msra.mxu0 0.0
        %1423 = vmatprep.subr.mxu0 0.0
        %1424 = vmatpush1.msra.mxu0 0.0
        %1425 = vmatprep.subr.mxu0 0.0
        %1426 = vmatpush1.msra.mxu0 0.0
        %1427 = vmatprep.subr.mxu0 0.0
        %1428 = vmatpush1.msra.mxu0 0.0
        %1429 = vmatprep.subr.mxu0 0.0
        %1430 = vmatpush1.msra.mxu0 0.0
        %1431 = vmatprep.subr.mxu0 0.0
        %1432 = vmatpush1.msra.mxu0 0.0
        %1433 = vmatprep.mubr.f32.mxu0 0.0
        %v1434 = vand.u32 %v1131, 4294901760
        %v1435 = vsub.f32 %v1131, %v1434
        %v1436 = vand.u32 %v1435, 4294901760
        %1437 = vmatmul.mubr.f32.gmra.mrb[0].mxu0 %v1436
        %v1438 = vpop.f32.mrb[0].mxu0
        %v1439 = vadd.f32 %v1364, %v1438
        %v1440 = vpop.f32.mrb[0].mxu0
        %1441 = vdwg.mxu0
        %1442 = vmatprep.subr.mxu0 0.0
        %v1443 = vand.u32 %v192, 4294901760
        %v1444 = vsub.f32 %v192, %v1443
        %v1445 = vand.u32 %v1444, 4294901760
        %1446 = vmatpush1.msra.mxu0 %v1445
        %1447 = vmatprep.subr.mxu0 0.0
        %v1448 = vand.u32 %v193, 4294901760
        %v1449 = vsub.f32 %v193, %v1448
        %v1450 = vand.u32 %v1449, 4294901760
        %1451 = vmatpush1.msra.mxu0 %v1450
        %1452 = vmatprep.subr.mxu0 0.0
        %1453 = vmatpush1.msra.mxu0 0.0
        %1454 = vmatprep.subr.mxu0 0.0
        %1455 = vmatpush1.msra.mxu0 0.0
        %1456 = vmatprep.subr.mxu0 0.0
        %1457 = vmatpush1.msra.mxu0 0.0
        %1458 = vmatprep.subr.mxu0 0.0
        %1459 = vmatpush1.msra.mxu0 0.0
        %1460 = vmatprep.subr.mxu0 0.0
        %1461 = vmatpush1.msra.mxu0 0.0
        %1462 = vmatprep.subr.mxu0 0.0
        %1463 = vmatpush1.msra.mxu0 0.0
        %1464 = vmatprep.subr.mxu0 0.0
        %1465 = vmatpush1.msra.mxu0 0.0
        %1466 = vmatprep.subr.mxu0 0.0
        %1467 = vmatpush1.msra.mxu0 0.0
        %1468 = vmatprep.subr.mxu0 0.0
        %1469 = vmatpush1.msra.mxu0 0.0
        %1470 = vmatprep.subr.mxu0 0.0
        %1471 = vmatpush1.msra.mxu0 0.0
        %1472 = vmatprep.subr.mxu0 0.0
        %1473 = vmatpush1.msra.mxu0 0.0
        %1474 = vmatprep.subr.mxu0 0.0
        %1475 = vmatpush1.msra.mxu0 0.0
        %1476 = vmatprep.subr.mxu0 0.0
        %1477 = vmatpush1.msra.mxu0 0.0
        %1478 = vmatprep.subr.mxu0 0.0
        %1479 = vmatpush1.msra.mxu0 0.0
        %1480 = vmatprep.subr.mxu0 0.0
        %1481 = vmatpush1.msra.mxu0 0.0
        %1482 = vmatprep.subr.mxu0 0.0
        %1483 = vmatpush1.msra.mxu0 0.0
        %1484 = vmatprep.subr.mxu0 0.0
        %1485 = vmatpush1.msra.mxu0 0.0
        %1486 = vmatprep.subr.mxu0 0.0
        %1487 = vmatpush1.msra.mxu0 0.0
        %1488 = vmatprep.subr.mxu0 0.0
        %1489 = vmatpush1.msra.mxu0 0.0
        %1490 = vmatprep.subr.mxu0 0.0
        %1491 = vmatpush1.msra.mxu0 0.0
        %1492 = vmatprep.subr.mxu0 0.0
        %1493 = vmatpush1.msra.mxu0 0.0
        %1494 = vmatprep.subr.mxu0 0.0
        %1495 = vmatpush1.msra.mxu0 0.0
        %1496 = vmatprep.subr.mxu0 0.0
        %1497 = vmatpush1.msra.mxu0 0.0
        %1498 = vmatprep.subr.mxu0 0.0
        %1499 = vmatpush1.msra.mxu0 0.0
        %1500 = vmatprep.subr.mxu0 0.0
        %1501 = vmatpush1.msra.mxu0 0.0
        %1502 = vmatprep.subr.mxu0 0.0
        %1503 = vmatpush1.msra.mxu0 0.0
        %1504 = vmatprep.subr.mxu0 0.0
        %1505 = vmatpush1.msra.mxu0 0.0
        %1506 = vmatprep.subr.mxu0 0.0
        %1507 = vmatpush1.msra.mxu0 0.0
        %1508 = vmatprep.subr.mxu0 0.0
        %1509 = vmatpush1.msra.mxu0 0.0
        %1510 = vmatprep.subr.mxu0 0.0
        %1511 = vmatpush1.msra.mxu0 0.0
        %1512 = vmatprep.mubr.f32.mxu0 0.0
        %v1513 = vand.u32 %v1131, 4294901760
        %1514 = vmatmul.mubr.f32.gmra.mrb[0].mxu0 %v1513
        %v1515 = vpop.f32.mrb[0].mxu0
        %v1516 = vadd.f32 %v1439, %v1515
        %v1517 = vpop.f32.mrb[0].mxu0
        %1518 = vdwg.mxu0
        %1519 = vmatprep.subr.mxu0 0.0
        %v1520 = vand.u32 %v192, 4294901760
        %1521 = vmatpush1.msra.mxu0 %v1520
        %1522 = vmatprep.subr.mxu0 0.0
        %v1523 = vand.u32 %v193, 4294901760
        %1524 = vmatpush1.msra.mxu0 %v1523
        %1525 = vmatprep.subr.mxu0 0.0
        %1526 = vmatpush1.msra.mxu0 0.0
        %1527 = vmatprep.subr.mxu0 0.0
        %1528 = vmatpush1.msra.mxu0 0.0
        %1529 = vmatprep.subr.mxu0 0.0
        %1530 = vmatpush1.msra.mxu0 0.0
        %1531 = vmatprep.subr.mxu0 0.0
        %1532 = vmatpush1.msra.mxu0 0.0
        %1533 = vmatprep.subr.mxu0 0.0
        %1534 = vmatpush1.msra.mxu0 0.0
        %1535 = vmatprep.subr.mxu0 0.0
        %1536 = vmatpush1.msra.mxu0 0.0
        %1537 = vmatprep.subr.mxu0 0.0
        %1538 = vmatpush1.msra.mxu0 0.0
        %1539 = vmatprep.subr.mxu0 0.0
        %1540 = vmatpush1.msra.mxu0 0.0
        %1541 = vmatprep.subr.mxu0 0.0
        %1542 = vmatpush1.msra.mxu0 0.0
        %1543 = vmatprep.subr.mxu0 0.0
        %1544 = vmatpush1.msra.mxu0 0.0
        %1545 = vmatprep.subr.mxu0 0.0
        %1546 = vmatpush1.msra.mxu0 0.0
        %1547 = vmatprep.subr.mxu0 0.0
        %1548 = vmatpush1.msra.mxu0 0.0
        %1549 = vmatprep.subr.mxu0 0.0
        %1550 = vmatpush1.msra.mxu0 0.0
        %1551 = vmatprep.subr.mxu0 0.0
        %1552 = vmatpush1.msra.mxu0 0.0
        %1553 = vmatprep.subr.mxu0 0.0
        %1554 = vmatpush1.msra.mxu0 0.0
        %1555 = vmatprep.subr.mxu0 0.0
        %1556 = vmatpush1.msra.mxu0 0.0
        %1557 = vmatprep.subr.mxu0 0.0
        %1558 = vmatpush1.msra.mxu0 0.0
        %1559 = vmatprep.subr.mxu0 0.0
        %1560 = vmatpush1.msra.mxu0 0.0
        %1561 = vmatprep.subr.mxu0 0.0
        %1562 = vmatpush1.msra.mxu0 0.0
        %1563 = vmatprep.subr.mxu0 0.0
        %1564 = vmatpush1.msra.mxu0 0.0
        %1565 = vmatprep.subr.mxu0 0.0
        %1566 = vmatpush1.msra.mxu0 0.0
        %1567 = vmatprep.subr.mxu0 0.0
        %1568 = vmatpush1.msra.mxu0 0.0
        %1569 = vmatprep.subr.mxu0 0.0
        %1570 = vmatpush1.msra.mxu0 0.0
        %1571 = vmatprep.subr.mxu0 0.0
        %1572 = vmatpush1.msra.mxu0 0.0
        %1573 = vmatprep.subr.mxu0 0.0
        %1574 = vmatpush1.msra.mxu0 0.0
        %1575 = vmatprep.subr.mxu0 0.0
        %1576 = vmatpush1.msra.mxu0 0.0
        %1577 = vmatprep.subr.mxu0 0.0
        %1578 = vmatpush1.msra.mxu0 0.0
        %1579 = vmatprep.subr.mxu0 0.0
        %1580 = vmatpush1.msra.mxu0 0.0
        %1581 = vmatprep.subr.mxu0 0.0
        %1582 = vmatpush1.msra.mxu0 0.0
        %1583 = vmatprep.subr.mxu0 0.0
        %1584 = vmatpush1.msra.mxu0 0.0
        %1585 = vmatprep.mubr.f32.mxu0 0.0
        %v1586 = vand.u32 %v1131, 4294901760
        %1587 = vmatmul.mubr.f32.gmra.mrb[0].mxu0 %v1586
        %v1588 = vpop.f32.mrb[0].mxu0
        %v1589 = vadd.f32 %v1516, %v1588
        %v1590 = vpop.f32.mrb[0].mxu0
        %1591 = vdwg.mxu0
        %1592 = vst [vmem:[%s183 + $0x10] sm:$0xff] %v1589
        %s1593 = sand.u32 %s109, 1
        %s1594 = scalar_lea.sflag [#allocation3], %s1593
        %s1595 = sand.u32 %s109, 1
        %s1596 = smul.addr %s1595, 24
        %s1597 = scalar_lea.vmem [#allocation2], %s1596
        // Predicated region
        $region33: #{tpu_custom_call.1} parent=31 // pred_check
          %p1598 = pneg %p119
        $region34: #{tpu_custom_call.1} parent=31 // pred_check_branch
          %1600 = sbr.rel (%p1598) target = $region36
        $region35: #{tpu_custom_call.1} parent=31 // pred_region
          %s1602 = ssub.s32 384, 384
          %1603 = vsyncadd %s1594, %s1602
          %s1604 = smul.addr %s22, 3
          %s1605 = smul.addr %s21, 3
          %s1606 = sadd.s32 %s1604, %s1605
          %s1607 = smul.addr %s1606, 128
          %s1608 = scalar_lea.hbm %s3, %s1607
          %s1610 = sshll.u32 %s1597, 4
          %s1611 = int_to_ptr.vmem [resolvable:$true] %s1610
          %1613 = dma.vmem_to_hbm [thread:$0]  %s1611, 384, %s1608, %s1594
        $region36: #{tpu_custom_call.1} parent=31 // pred_fallthru
          _
      $region32: #{tpu_custom_call.1} parent=5 // pred_fallthru
        _
      %p1614 = scmp.le.s32.totalorder 2, %s12
      // Predicated region
      $region37: #{tpu_custom_call.1} parent=5 // pred_check
        %p1615 = pneg %p1614
      $region38: #{tpu_custom_call.1} parent=5 // pred_check_branch
        %1617 = sbr.rel (%p1615) target = $region40
      $region39: #{tpu_custom_call.1} parent=5 // pred_region
        %s1618 = ssub.s32 %s12, 2
        // Predicated region
        $region41: #{tpu_custom_call.1} parent=39 // pred_check
          %p1619 = pneg %p125
        $region42: #{tpu_custom_call.1} parent=39 // pred_check_branch
          %1621 = sbr.rel (%p1619) target = $region44
        $region43: #{tpu_custom_call.1} parent=39 // pred_region
          %s1622 = sand.u32 %s110, 1
          %s1623 = scalar_lea.sflag [#allocation3], %s1622
          %s1624 = sand.u32 %s110, 1
          %s1625 = smul.addr %s1624, 24
          %s1626 = scalar_lea.vmem [#allocation2], %s1625
          %1627 = dma.done %s1623, 384
        $region44: #{tpu_custom_call.1} parent=39 // pred_fallthru
          _
      $region40: #{tpu_custom_call.1} parent=5 // pred_fallthru
        _
    $region6: #{tpu_custom_call.1} parent=1 // loop_footer
      %s16 = sadd.s32 1, %s12
    $region7: #{tpu_custom_call.1} parent=1 // loop_footer_branch
      %11 = sbr.rel target = $region3
    $region8: #{tpu_custom_call.1} parent=1 // loop_exit
      _
    %1628 = vsyncpa [#allocation3], 1
    %s1629 = scalar_lea.sflag [#allocation3], 1
    %1630 = vsyncpa %s1629, 1

</llo_original>
